<compile_context>
chip_gen: v7x
topology: tpu7x:2x2x1
jax: 0.10.0
libtpu: 0.0.40
codegen_flags: <defaults>
</compile_context>

<pallas_src>
import functools
import math

import jax
import jax.numpy as jnp
from jax.experimental import pallas as pl
from jax.experimental.pallas import tpu as pltpu

D_SHIFT = 0.1      # MyModel.d_shift
VAR_EPS = 1e-5     # VarianceEncoder.eps
VAR_INIT = 0.1     # VarianceEncoder init

# Row ranges of each parameter inside the packed (rows, 5) f32 slab.
_W1, _B1 = (0, 2), (2, 3)      # (2,5), (1,5)
_W2, _B2 = (3, 8), (8, 9)      # (5,5), (1,5)
_W3, _B3 = (9, 14), (14, 15)   # (5,2), (1,2)
_CW, _CB = (15, 17), (17, 18)  # (2,2), (1,2)
_DVB = (18, 21)                # (3,4)
_SLAB_COLS = 5


def _softplus(b):
    """Numerically stable softplus (matches F.softplus semantics)."""
    return jnp.maximum(b, 0.0) + jnp.log(1.0 + jnp.exp(-jnp.abs(b)))


def _dot(a, b):
    return jnp.dot(a, b, preferred_element_type=jnp.float32,
                   precision=jax.lax.Precision.HIGHEST)


def _x_chain(x, slab_ref):
    """lx_1 -> lx_2 -> lx_3 applied to (N,2) rows."""
    w1 = slab_ref[_W1[0]:_W1[1], 0:5]
    b1 = slab_ref[_B1[0]:_B1[1], 0:5]
    w2 = slab_ref[_W2[0]:_W2[1], 0:5]
    b2 = slab_ref[_B2[0]:_B2[1], 0:5]
    w3 = slab_ref[_W3[0]:_W3[1], 0:2]
    b3 = slab_ref[_B3[0]:_B3[1], 0:2]
    h = _dot(x, w1) + b1
    h = _dot(h, w2) + b2
    return _dot(h, w3) + b3


def _classifier(z, slab_ref):
    cw = slab_ref[_CW[0]:_CW[1], 0:2]
    cb = slab_ref[_CB[0]:_CB[1], 0:2]
    return _dot(z, cw) + cb


def _mymodel_kernel(acts_ref, slab_ref, out_ref, *, n_dom):
    """Non-warmup forward: x_loss, y_loss, d_reg in one pass."""
    n = acts_ref.shape[0] // 2          # n_dom * batch rows per stream
    n_feat = acts_ref.shape[1]
    x_in = acts_ref[0:n, :]             # all_x flattened (n, 2)
    y_in = acts_ref[n:2 * n, :]         # all_y flattened (n, 2)

    x = _x_chain(x_in, slab_ref)        # (n, 2)
    pred_x = _classifier(x, slab_ref)
    pred_y = _classifier(y_in, slab_ref)   # _y_forward is identity (y_map=False)

    # sum over domains of per-domain MSE == n_dom * MSE over flattened rows.
    x_loss = float(n_dom) * jnp.mean((pred_x - y_in) ** 2, keepdims=True)
    y_loss = float(n_dom) * jnp.mean((pred_y - y_in) ** 2, keepdims=True)

    # MeanEncoder is identity; d_all_means_mean = per-column means of x and y.
    m_x = jnp.mean(x, axis=0, keepdims=True)       # (1, 2)
    m_y = jnp.mean(y_in, axis=0, keepdims=True)    # (1, 2)

    # VarianceEncoder: softplus(b) + eps, averaged over the n_dom encoders.
    dvb = slab_ref[_DVB[0]:_DVB[1], 0:4]           # (3, 4)
    v_mean = jnp.mean(_softplus(dvb) + VAR_EPS, axis=0, keepdims=True)  # (1,4)
    log_v_mean = jnp.mean(jnp.log(v_mean), keepdims=True)               # (1,1)

    # vlb = (means_mean - cat([x, y], -1))**2 + log(vars_mean), mean over all.
    sq = (jnp.sum((m_x - x) ** 2, keepdims=True)
          + jnp.sum((m_y - y_in) ** 2, keepdims=True))
    vlb_mean = sq * (1.0 / float(2 * n * n_feat)) + log_v_mean
    d_reg = vlb_mean * (0.5 * D_SHIFT)

    lane = jax.lax.broadcasted_iota(jnp.int32, out_ref.shape, 1)
    out_ref[...] = jnp.where(lane == 0, x_loss,
                             jnp.where(lane == 1, y_loss,
                                       jnp.where(lane == 2, d_reg, 0.0)))


def _mymodel_warmup_kernel(acts_ref, slab_ref, out_ref, *, n_dom):
    """Warmup forward: only x_loss (no dvar rows in the slab)."""
    n = acts_ref.shape[0] // 2
    x_in = acts_ref[0:n, :]
    y_tgt = acts_ref[n:2 * n, :]
    pred = _classifier(_x_chain(x_in, slab_ref), slab_ref)
    x_loss = float(n_dom) * jnp.mean((pred - y_tgt) ** 2, keepdims=True)
    lane = jax.lax.broadcasted_iota(jnp.int32, out_ref.shape, 1)
    out_ref[...] = jnp.where(lane == 0, x_loss, 0.0)


def _pack_params(params, include_var=True):
    """Pack all parameters into one (rows, 5) f32 slab -> single DMA."""
    def pad_cols(a):
        return jnp.pad(a, ((0, 0), (0, _SLAB_COLS - a.shape[1])))
    rows = [params["w1"], params["b1"], params["w2"], params["b2"],
            pad_cols(params["w3"]), pad_cols(params["b3"]),
            pad_cols(params["cw"]), pad_cols(params["cb"])]
    if include_var:
        rows.append(pad_cols(params["dvar_b"]))
    return jnp.concatenate(rows, axis=0).astype(jnp.float32)


def mymodel_forward(all_x, all_y, params, warmup=False):
    """Single-block Pallas kernel for MyModel.forward; returns the loss dict."""
    n_dom, _, n_feat = all_x.shape
    # One activation DMA: [all x rows ; all y rows]  (48, 2)
    acts = jnp.concatenate([all_x.reshape(-1, n_feat),
                            all_y.reshape(-1, n_feat)], axis=0)
    slab = _pack_params(params, include_var=not warmup)
    kernel = _mymodel_warmup_kernel if warmup else _mymodel_kernel

    out = pl.pallas_call(
        functools.partial(kernel, n_dom=n_dom),
        out_shape=jax.ShapeDtypeStruct((1, 128), jnp.float32),
        grid=(),
        in_specs=[pl.BlockSpec(acts.shape, lambda: (0, 0)),
                  pl.BlockSpec(slab.shape, lambda: (0, 0))],
        out_specs=pl.BlockSpec((1, 128), lambda: (0, 0)),
        compiler_params=pltpu.CompilerParams(vmem_limit_bytes=4 << 20),
        cost_estimate=pl.CostEstimate(flops=2048, transcendentals=16,
                                      bytes_accessed=2048),
    )(acts, slab)

    res = {"x_loss": out[0, 0]}
    if not warmup:
        res["y_loss"] = out[0, 1]
        res["d_reg"] = out[0, 2]
    return res


def reference_forward(all_x, all_y, params, warmup=False):
    """Pure-JAX reference mirroring the PyTorch module (forward only)."""
    def lin(x, w, b):
        return jnp.dot(x, w, precision=jax.lax.Precision.HIGHEST) + b

    n_dom = all_x.shape[0]
    x_loss = 0.0
    y_loss = 0.0
    xs, ys, d_means, d_vars = [], [], [], []
    for i in range(n_dom):
        x = lin(lin(lin(all_x[i], params["w1"], params["b1"]),
                    params["w2"], params["b2"]), params["w3"], params["b3"])
        pred = lin(x, params["cw"], params["cb"])
        x_loss = x_loss + jnp.mean((pred - all_y[i]) ** 2)
        if not warmup:
            y = all_y[i]
            pred_y = lin(y, params["cw"], params["cb"])
            y_loss = y_loss + jnp.mean((pred_y - all_y[i]) ** 2)
            d_means.append(jnp.concatenate([x, y], axis=-1))
            d_vars.append(jax.nn.softplus(params["dvar_b"][i:i + 1]) + VAR_EPS)
            xs.append(x)
            ys.append(y)
    res = {"x_loss": x_loss}
    if not warmup:
        x_s = jnp.stack(xs)
        y_s = jnp.stack(ys)
        m_mean = jnp.stack(d_means).reshape(-1, 4).mean(0)
        v_mean = jnp.stack(d_vars).reshape(-1, 4).mean(0)
        feat_y = jnp.concatenate([x_s, y_s], axis=-1)
        vlb = (m_mean - feat_y) ** 2 + jnp.log(v_mean)
        res["y_loss"] = y_loss
        res["d_reg"] = (vlb.mean() / 2.0) * D_SHIFT
    return res


def init_params(key):
    ks = jax.random.split(key, 8)

    def lin_init(kw, kb, d_in, d_out):
        lim = 1.0 / math.sqrt(d_in)
        w = jax.random.uniform(kw, (d_in, d_out), jnp.float32, -lim, lim)
        b = jax.random.uniform(kb, (1, d_out), jnp.float32, -lim, lim)
        return w, b

    w1, b1 = lin_init(ks[0], ks[1], 2, 5)
    w2, b2 = lin_init(ks[2], ks[3], 5, 5)
    w3, b3 = lin_init(ks[4], ks[5], 5, 2)
    cw, cb = lin_init(ks[6], ks[7], 2, 2)
    # VarianceEncoder parameter: b = log(exp(init - eps) - 1), shape (1,4) per
    # encoder, stacked over the 3 encoders -> (3, 4).
    b_init = math.log(math.exp(VAR_INIT - VAR_EPS) - 1.0)
    dvar_b = jnp.full((3, 4), b_init, jnp.float32)
    return dict(w1=w1, b1=b1, w2=w2, b2=b2, w3=w3, b3=b3, cw=cw, cb=cb,
                dvar_b=dvar_b)


if __name__ == "__main__":
    key = jax.random.PRNGKey(0)
    k_params, k_x, k_y = jax.random.split(key, 3)
    params = init_params(k_params)
    # 3 domains (one per mean/var encoder), batch 8, feature dim 2.
    all_x = jax.random.normal(k_x, (3, 8, 2), dtype=jnp.float32)
    all_y = jax.random.normal(k_y, (3, 8, 2), dtype=jnp.float32)

    # Non-warmup path (x_loss, y_loss, d_reg).
    res = jax.block_until_ready(mymodel_forward(all_x, all_y, params,
                                                warmup=False))
    ref = reference_forward(all_x, all_y, params, warmup=False)
    for name in ("x_loss", "y_loss", "d_reg"):
        got = float(res[name])
        want = float(ref[name])
        assert abs(got - want) <= 1e-4 + 1e-4 * abs(want), (name, got, want)

    # Warmup path (x_loss only, specialized kernel).
    res_w = jax.block_until_ready(mymodel_forward(all_x, all_y, params,
                                                  warmup=True))
    ref_w = reference_forward(all_x, all_y, params, warmup=True)
    got = float(res_w["x_loss"])
    want = float(ref_w["x_loss"])
    assert abs(got - want) <= 1e-4 + 1e-4 * abs(want), ("warmup_x_loss", got, want)

    print("KERNEL_OK")
</pallas_src>

<mosaic_0001>
module attributes {stable_mosaic.version = 11 : i64} {
  func.func @_mymodel_kernel(%arg0: memref<48x2xf32, #tpu.memory_space<vmem>>, %arg1: memref<21x5xf32, #tpu.memory_space<vmem>>, %arg2: memref<1x128xf32, #tpu.memory_space<vmem>>) attributes {dimension_semantics = [], scalar_prefetch = 0 : i64, scratch_operands = 0 : i64, tpu.core_type = #tpu.core_type<tc>} {
    %c0 = arith.constant 0 : index
    %c0_0 = arith.constant 0 : index
    %0 = vector.load %arg0[%c0, %c0_0] : memref<48x2xf32, #tpu.memory_space<vmem>>, vector<24x2xf32>
    %c24 = arith.constant 24 : index
    %c0_1 = arith.constant 0 : index
    %1 = vector.load %arg0[%c24, %c0_1] : memref<48x2xf32, #tpu.memory_space<vmem>>, vector<24x2xf32>
    %c0_2 = arith.constant 0 : index
    %c0_3 = arith.constant 0 : index
    %2 = vector.load %arg1[%c0_2, %c0_3] : memref<21x5xf32, #tpu.memory_space<vmem>>, vector<2x5xf32>
    %c2 = arith.constant 2 : index
    %c0_4 = arith.constant 0 : index
    %3 = vector.load %arg1[%c2, %c0_4] : memref<21x5xf32, #tpu.memory_space<vmem>>, vector<1x5xf32>
    %c3 = arith.constant 3 : index
    %c0_5 = arith.constant 0 : index
    %4 = vector.load %arg1[%c3, %c0_5] : memref<21x5xf32, #tpu.memory_space<vmem>>, vector<5x5xf32>
    %c8 = arith.constant 8 : index
    %c0_6 = arith.constant 0 : index
    %5 = vector.load %arg1[%c8, %c0_6] : memref<21x5xf32, #tpu.memory_space<vmem>>, vector<1x5xf32>
    %c9 = arith.constant 9 : index
    %c0_7 = arith.constant 0 : index
    %6 = vector.load %arg1[%c9, %c0_7] : memref<21x5xf32, #tpu.memory_space<vmem>>, vector<5x2xf32>
    %c14 = arith.constant 14 : index
    %c0_8 = arith.constant 0 : index
    %7 = vector.load %arg1[%c14, %c0_8] : memref<21x5xf32, #tpu.memory_space<vmem>>, vector<1x2xf32>
    %cst = arith.constant dense<0.000000e+00> : vector<24x5xf32>
    %8 = tpu.matmul %0, %2, %cst {dimension_numbers = #tpu.dot_dimension_numbers<[1], [0], [0], [1], [0, 0, 1, 1], [], []>, precision = #tpu.contract_precision<fp32>} : vector<24x2xf32>, vector<2x5xf32>, vector<24x5xf32> -> vector<24x5xf32>
    %9 = vector.broadcast %3 : vector<1x5xf32> to vector<24x5xf32>
    %10 = arith.addf %8, %9 : vector<24x5xf32>
    %cst_9 = arith.constant dense<0.000000e+00> : vector<24x5xf32>
    %11 = tpu.matmul %10, %4, %cst_9 {dimension_numbers = #tpu.dot_dimension_numbers<[1], [0], [0], [1], [0, 0, 1, 1], [], []>, precision = #tpu.contract_precision<fp32>} : vector<24x5xf32>, vector<5x5xf32>, vector<24x5xf32> -> vector<24x5xf32>
    %12 = vector.broadcast %5 : vector<1x5xf32> to vector<24x5xf32>
    %13 = arith.addf %11, %12 : vector<24x5xf32>
    %cst_10 = arith.constant dense<0.000000e+00> : vector<24x2xf32>
    %14 = tpu.matmul %13, %6, %cst_10 {dimension_numbers = #tpu.dot_dimension_numbers<[1], [0], [0], [1], [0, 0, 1, 1], [], []>, precision = #tpu.contract_precision<fp32>} : vector<24x5xf32>, vector<5x2xf32>, vector<24x2xf32> -> vector<24x2xf32>
    %15 = vector.broadcast %7 : vector<1x2xf32> to vector<24x2xf32>
    %16 = arith.addf %14, %15 : vector<24x2xf32>
    %c15 = arith.constant 15 : index
    %c0_11 = arith.constant 0 : index
    %17 = vector.load %arg1[%c15, %c0_11] : memref<21x5xf32, #tpu.memory_space<vmem>>, vector<2x2xf32>
    %c17 = arith.constant 17 : index
    %c0_12 = arith.constant 0 : index
    %18 = vector.load %arg1[%c17, %c0_12] : memref<21x5xf32, #tpu.memory_space<vmem>>, vector<1x2xf32>
    %cst_13 = arith.constant dense<0.000000e+00> : vector<24x2xf32>
    %19 = tpu.matmul %16, %17, %cst_13 {dimension_numbers = #tpu.dot_dimension_numbers<[1], [0], [0], [1], [0, 0, 1, 1], [], []>, precision = #tpu.contract_precision<fp32>} : vector<24x2xf32>, vector<2x2xf32>, vector<24x2xf32> -> vector<24x2xf32>
    %20 = vector.broadcast %18 : vector<1x2xf32> to vector<24x2xf32>
    %21 = arith.addf %19, %20 : vector<24x2xf32>
    %c15_14 = arith.constant 15 : index
    %c0_15 = arith.constant 0 : index
    %22 = vector.load %arg1[%c15_14, %c0_15] : memref<21x5xf32, #tpu.memory_space<vmem>>, vector<2x2xf32>
    %c17_16 = arith.constant 17 : index
    %c0_17 = arith.constant 0 : index
    %23 = vector.load %arg1[%c17_16, %c0_17] : memref<21x5xf32, #tpu.memory_space<vmem>>, vector<1x2xf32>
    %cst_18 = arith.constant dense<0.000000e+00> : vector<24x2xf32>
    %24 = tpu.matmul %1, %22, %cst_18 {dimension_numbers = #tpu.dot_dimension_numbers<[1], [0], [0], [1], [0, 0, 1, 1], [], []>, precision = #tpu.contract_precision<fp32>} : vector<24x2xf32>, vector<2x2xf32>, vector<24x2xf32> -> vector<24x2xf32>
    %25 = vector.broadcast %23 : vector<1x2xf32> to vector<24x2xf32>
    %26 = arith.addf %24, %25 : vector<24x2xf32>
    %27 = arith.subf %21, %1 : vector<24x2xf32>
    %28 = arith.mulf %27, %27 : vector<24x2xf32>
    %29 = vector.shape_cast %28 : vector<24x2xf32> to vector<1x24x2xf32>
    %cst_19 = arith.constant dense<0.000000e+00> : vector<1xf32>
    %30 = vector.multi_reduction <add>, %29, %cst_19 [1, 2] : vector<1x24x2xf32> to vector<1xf32>
    %31 = vector.shape_cast %30 : vector<1xf32> to vector<1x1x1xf32>
    %32 = vector.extract %31[0, 0, 0] : f32 from vector<1x1x1xf32>
    %33 = vector.broadcast %32 : f32 to vector<1x1xf32>
    %cst_20 = arith.constant 4.800000e+01 : f32
    %34 = vector.broadcast %cst_20 : f32 to vector<1x1xf32>
    %35 = arith.divf %33, %34 : vector<1x1xf32>
    %cst_21 = arith.constant 3.000000e+00 : f32
    %36 = vector.broadcast %cst_21 : f32 to vector<1x1xf32>
    %37 = arith.mulf %36, %35 : vector<1x1xf32>
    %38 = arith.subf %26, %1 : vector<24x2xf32>
    %39 = arith.mulf %38, %38 : vector<24x2xf32>
    %40 = vector.shape_cast %39 : vector<24x2xf32> to vector<1x24x2xf32>
    %cst_22 = arith.constant dense<0.000000e+00> : vector<1xf32>
    %41 = vector.multi_reduction <add>, %40, %cst_22 [1, 2] : vector<1x24x2xf32> to vector<1xf32>
    %42 = vector.shape_cast %41 : vector<1xf32> to vector<1x1x1xf32>
    %43 = vector.extract %42[0, 0, 0] : f32 from vector<1x1x1xf32>
    %44 = vector.broadcast %43 : f32 to vector<1x1xf32>
    %cst_23 = arith.constant 4.800000e+01 : f32
    %45 = vector.broadcast %cst_23 : f32 to vector<1x1xf32>
    %46 = arith.divf %44, %45 : vector<1x1xf32>
    %cst_24 = arith.constant 3.000000e+00 : f32
    %47 = vector.broadcast %cst_24 : f32 to vector<1x1xf32>
    %48 = arith.mulf %47, %46 : vector<1x1xf32>
    %cst_25 = arith.constant dense<0.000000e+00> : vector<2xf32>
    %49 = vector.multi_reduction <add>, %16, %cst_25 [0] : vector<24x2xf32> to vector<2xf32>
    %50 = vector.shape_cast %49 : vector<2xf32> to vector<1x2xf32>
    %cst_26 = arith.constant 2.400000e+01 : f32
    %51 = vector.broadcast %cst_26 : f32 to vector<1x2xf32>
    %52 = arith.divf %50, %51 : vector<1x2xf32>
    %cst_27 = arith.constant dense<0.000000e+00> : vector<2xf32>
    %53 = vector.multi_reduction <add>, %1, %cst_27 [0] : vector<24x2xf32> to vector<2xf32>
    %54 = vector.shape_cast %53 : vector<2xf32> to vector<1x2xf32>
    %cst_28 = arith.constant 2.400000e+01 : f32
    %55 = vector.broadcast %cst_28 : f32 to vector<1x2xf32>
    %56 = arith.divf %54, %55 : vector<1x2xf32>
    %c18 = arith.constant 18 : index
    %c0_29 = arith.constant 0 : index
    %57 = vector.load %arg1[%c18, %c0_29] : memref<21x5xf32, #tpu.memory_space<vmem>>, vector<3x4xf32>
    %cst_30 = arith.constant 0.000000e+00 : f32
    %58 = vector.broadcast %cst_30 : f32 to vector<3x4xf32>
    %59 = arith.maximumf %57, %58 : vector<3x4xf32>
    %60 = math.absf %57 : vector<3x4xf32>
    %cst_31 = arith.constant 0.000000e+00 : f32
    %61 = vector.broadcast %cst_31 : f32 to vector<3x4xf32>
    %62 = arith.subf %61, %60 : vector<3x4xf32>
    %63 = math.exp %62 : vector<3x4xf32>
    %cst_32 = arith.constant 1.000000e+00 : f32
    %64 = vector.broadcast %cst_32 : f32 to vector<3x4xf32>
    %65 = arith.addf %64, %63 : vector<3x4xf32>
    %66 = math.log %65 : vector<3x4xf32>
    %67 = arith.addf %59, %66 : vector<3x4xf32>
    %cst_33 = arith.constant 9.99999974E-6 : f32
    %68 = vector.broadcast %cst_33 : f32 to vector<3x4xf32>
    %69 = arith.addf %67, %68 : vector<3x4xf32>
    %cst_34 = arith.constant dense<0.000000e+00> : vector<4xf32>
    %70 = vector.multi_reduction <add>, %69, %cst_34 [0] : vector<3x4xf32> to vector<4xf32>
    %71 = vector.shape_cast %70 : vector<4xf32> to vector<1x4xf32>
    %cst_35 = arith.constant 3.000000e+00 : f32
    %72 = vector.broadcast %cst_35 : f32 to vector<1x4xf32>
    %73 = arith.divf %71, %72 : vector<1x4xf32>
    %74 = math.log %73 : vector<1x4xf32>
    %75 = vector.shape_cast %74 : vector<1x4xf32> to vector<1x1x4xf32>
    %cst_36 = arith.constant dense<0.000000e+00> : vector<1xf32>
    %76 = vector.multi_reduction <add>, %75, %cst_36 [1, 2] : vector<1x1x4xf32> to vector<1xf32>
    %77 = vector.shape_cast %76 : vector<1xf32> to vector<1x1x1xf32>
    %78 = vector.extract %77[0, 0, 0] : f32 from vector<1x1x1xf32>
    %79 = vector.broadcast %78 : f32 to vector<1x1xf32>
    %cst_37 = arith.constant 4.000000e+00 : f32
    %80 = vector.broadcast %cst_37 : f32 to vector<1x1xf32>
    %81 = arith.divf %79, %80 : vector<1x1xf32>
    %82 = vector.broadcast %52 : vector<1x2xf32> to vector<24x2xf32>
    %83 = arith.subf %82, %16 : vector<24x2xf32>
    %84 = arith.mulf %83, %83 : vector<24x2xf32>
    %85 = vector.shape_cast %84 : vector<24x2xf32> to vector<1x24x2xf32>
    %cst_38 = arith.constant dense<0.000000e+00> : vector<1xf32>
    %86 = vector.multi_reduction <add>, %85, %cst_38 [1, 2] : vector<1x24x2xf32> to vector<1xf32>
    %87 = vector.shape_cast %86 : vector<1xf32> to vector<1x1x1xf32>
    %88 = vector.extract %87[0, 0, 0] : f32 from vector<1x1x1xf32>
    %89 = vector.broadcast %88 : f32 to vector<1x1xf32>
    %90 = vector.broadcast %56 : vector<1x2xf32> to vector<24x2xf32>
    %91 = arith.subf %90, %1 : vector<24x2xf32>
    %92 = arith.mulf %91, %91 : vector<24x2xf32>
    %93 = vector.shape_cast %92 : vector<24x2xf32> to vector<1x24x2xf32>
    %cst_39 = arith.constant dense<0.000000e+00> : vector<1xf32>
    %94 = vector.multi_reduction <add>, %93, %cst_39 [1, 2] : vector<1x24x2xf32> to vector<1xf32>
    %95 = vector.shape_cast %94 : vector<1xf32> to vector<1x1x1xf32>
    %96 = vector.extract %95[0, 0, 0] : f32 from vector<1x1x1xf32>
    %97 = vector.broadcast %96 : f32 to vector<1x1xf32>
    %98 = arith.addf %89, %97 : vector<1x1xf32>
    %cst_40 = arith.constant 0.010416667 : f32
    %99 = vector.broadcast %cst_40 : f32 to vector<1x1xf32>
    %100 = arith.mulf %98, %99 : vector<1x1xf32>
    %101 = arith.addf %100, %81 : vector<1x1xf32>
    %cst_41 = arith.constant 5.000000e-02 : f32
    %102 = vector.broadcast %cst_41 : f32 to vector<1x1xf32>
    %103 = arith.mulf %101, %102 : vector<1x1xf32>
    %104 = tpu.iota {dimensions = array<i32: 1>} : vector<1x128xi32>
    %c0_i32 = arith.constant 0 : i32
    %105 = vector.broadcast %c0_i32 : i32 to vector<1x128xi32>
    %106 = arith.cmpi eq, %104, %105 : vector<1x128xi32>
    %c1_i32 = arith.constant 1 : i32
    %107 = vector.broadcast %c1_i32 : i32 to vector<1x128xi32>
    %108 = arith.cmpi eq, %104, %107 : vector<1x128xi32>
    %c2_i32 = arith.constant 2 : i32
    %109 = vector.broadcast %c2_i32 : i32 to vector<1x128xi32>
    %110 = arith.cmpi eq, %104, %109 : vector<1x128xi32>
    %cst_42 = arith.constant 0.000000e+00 : f32
    %111 = vector.shape_cast %103 : vector<1x1xf32> to vector<1x1xf32>
    %112 = vector.broadcast %111 : vector<1x1xf32> to vector<1x128xf32>
    %113 = vector.broadcast %cst_42 : f32 to vector<1x128xf32>
    %114 = arith.select %110, %112, %113 : vector<1x128xi1>, vector<1x128xf32>
    %115 = vector.shape_cast %48 : vector<1x1xf32> to vector<1x1xf32>
    %116 = vector.broadcast %115 : vector<1x1xf32> to vector<1x128xf32>
    %117 = arith.select %108, %116, %114 : vector<1x128xi1>, vector<1x128xf32>
    %118 = vector.shape_cast %37 : vector<1x1xf32> to vector<1x1xf32>
    %119 = vector.broadcast %118 : vector<1x1xf32> to vector<1x128xf32>
    %120 = arith.select %106, %119, %117 : vector<1x128xi1>, vector<1x128xf32>
    %c0_43 = arith.constant 0 : index
    %c0_44 = arith.constant 0 : index
    %121 = vector.load %arg2[%c0_43, %c0_44] : memref<1x128xf32, #tpu.memory_space<vmem>>, vector<1x128xf32>
    tpu.vector_store %arg2[%c0_43, %c0_44], %120 {strides = array<i32>} : memref<1x128xf32, #tpu.memory_space<vmem>>, vector<1x128xf32>,
    return
  }
}

</mosaic_0001>

<llo_original>
// kernel: tpu_custom_call.1
$region0: #{tpu_custom_call.1}
  #allocation0 [shape = 'u32[]', space=smem, size = 0x4, offset = 0x4, fixed_abs, tag = 'smem constant byte address 0x4 - core index']
  #allocation1 [shape = 'u32[144,128]{1,0:T(1,128)}', space=vmem, size = 0x12000, scoped, tag = 'internal scratch']
  %s0 = inlined_call_operand.vmem [shape: f32[48,2], index: 0, kind: input, shape index: {}]
  %s1 = inlined_call_operand.vmem [shape: f32[21,5], index: 1, kind: input, shape index: {}]
  %s2 = inlined_call_operand.hbm [shape: f32[1,128], index: 2, kind: output, shape index: {}]
  %s3 = sld [smem:[#allocation0]]
  $region18: #{tpu_custom_call.1} parent=0
    _
  %s5 = ssub.s32 1, %s3
  %s6 = scalar_select 0, %s5, %s3
  $region1: #{tpu_custom_call.1} parent=0
    #allocation2 [shape = 'u8[512]{0}', space=vmem, size = 0x400, scoped, tag = 'output window, operand 0, single buffered']
    #allocation3 [shape = 's32[1]{0}', space=sflag, size = 0x4, scoped, tag = 'scoped memory for tpu_custom_call.1']
    %7 = vsyncpa [#allocation3], 0
    // Predicated region
    $region2: #{tpu_custom_call.1} parent=1 // pred_check
      _
    $region3: #{tpu_custom_call.1} parent=1 // pred_check_branch
      %9 = sbr.rel (0) target = $region5
    $region4: #{tpu_custom_call.1} parent=1 // pred_region
      _
    $region5: #{tpu_custom_call.1} parent=1 // pred_fallthru
      _
    // Predicated region
    $region6: #{tpu_custom_call.1} parent=1 // pred_check
      _
    $region7: #{tpu_custom_call.1} parent=1 // pred_check_branch
      %11 = sbr.rel (0) target = $region9
    $region8: #{tpu_custom_call.1} parent=1 // pred_region
      _
    $region9: #{tpu_custom_call.1} parent=1 // pred_fallthru
      _
    %v12 = vld [vmem:[%s0] sm:$0xff]
    %v13 = vld [vmem:[%s0 + $0x8] sm:$0xff]
    %v14 = vld [vmem:[%s0 + $0x10] sm:$0xff]
    %v15 = vld [vmem:[%s0 + $0x18] sm:$0xff]
    %v16 = vld [vmem:[%s0 + $0x20] sm:$0xff]
    %v17 = vld [vmem:[%s0 + $0x28] sm:$0xff]
    %v18 = vld [vmem:[%s1] sm:$0x3]
    %v19 = vld [vmem:[%s1 + $0x2] sm:$0x1]
    %v20 = vld [vmem:[%s1 + $0x3] sm:$0x1f]
    %v21 = vld [vmem:[%s1 + $0x8] sm:$0x1]
    %v22 = vld [vmem:[%s1 + $0x9] sm:$0x1f]
    %v23 = vld [vmem:[%s1 + $0xe] sm:$0x1]
    %v24 = vlaneseq
    %v25 = vshrl.u32 %v24, 7
    %v26 = vsub.s32 0, %v25
    %v27 = vrot.slane %v19, %v26
    %vm28 = vcmask 15360
    %v30 = vsel %vm28, %v12, 0
    %v33 = vsel %vm28, %v13, 0
    %v36 = vsel %vm28, %v14, 0
    %vm38 = vcmask 1041408
    %v40 = vsel %vm38, %v18, 0
    %42 = vmatprep.subr.mxu0 0.0
    %v43 = vand.u32 %v40, 4294901760
    %44 = vmatpush1.msra.mxu0 %v43
    %45 = vmatprep.subr.mxu0 0.0
    %46 = vmatpush1.msra.mxu0 0.0
    %47 = vmatprep.subr.mxu0 0.0
    %48 = vmatpush1.msra.mxu0 0.0
    %49 = vmatprep.subr.mxu0 0.0
    %50 = vmatpush1.msra.mxu0 0.0
    %51 = vmatprep.subr.mxu0 0.0
    %52 = vmatpush1.msra.mxu0 0.0
    %53 = vmatprep.subr.mxu0 0.0
    %54 = vmatpush1.msra.mxu0 0.0
    %55 = vmatprep.subr.mxu0 0.0
    %56 = vmatpush1.msra.mxu0 0.0
    %57 = vmatprep.subr.mxu0 0.0
    %58 = vmatpush1.msra.mxu0 0.0
    %59 = vmatprep.subr.mxu0 0.0
    %60 = vmatpush1.msra.mxu0 0.0
    %61 = vmatprep.subr.mxu0 0.0
    %62 = vmatpush1.msra.mxu0 0.0
    %63 = vmatprep.subr.mxu0 0.0
    %64 = vmatpush1.msra.mxu0 0.0
    %65 = vmatprep.subr.mxu0 0.0
    %66 = vmatpush1.msra.mxu0 0.0
    %67 = vmatprep.subr.mxu0 0.0
    %68 = vmatpush1.msra.mxu0 0.0
    %69 = vmatprep.subr.mxu0 0.0
    %70 = vmatpush1.msra.mxu0 0.0
    %71 = vmatprep.subr.mxu0 0.0
    %72 = vmatpush1.msra.mxu0 0.0
    %73 = vmatprep.subr.mxu0 0.0
    %74 = vmatpush1.msra.mxu0 0.0
    %75 = vmatprep.subr.mxu0 0.0
    %76 = vmatpush1.msra.mxu0 0.0
    %77 = vmatprep.subr.mxu0 0.0
    %78 = vmatpush1.msra.mxu0 0.0
    %79 = vmatprep.subr.mxu0 0.0
    %80 = vmatpush1.msra.mxu0 0.0
    %81 = vmatprep.subr.mxu0 0.0
    %82 = vmatpush1.msra.mxu0 0.0
    %83 = vmatprep.subr.mxu0 0.0
    %84 = vmatpush1.msra.mxu0 0.0
    %85 = vmatprep.subr.mxu0 0.0
    %86 = vmatpush1.msra.mxu0 0.0
    %87 = vmatprep.subr.mxu0 0.0
    %88 = vmatpush1.msra.mxu0 0.0
    %89 = vmatprep.subr.mxu0 0.0
    %90 = vmatpush1.msra.mxu0 0.0
    %91 = vmatprep.subr.mxu0 0.0
    %92 = vmatpush1.msra.mxu0 0.0
    %93 = vmatprep.subr.mxu0 0.0
    %94 = vmatpush1.msra.mxu0 0.0
    %95 = vmatprep.subr.mxu0 0.0
    %96 = vmatpush1.msra.mxu0 0.0
    %97 = vmatprep.subr.mxu0 0.0
    %98 = vmatpush1.msra.mxu0 0.0
    %99 = vmatprep.subr.mxu0 0.0
    %100 = vmatpush1.msra.mxu0 0.0
    %101 = vmatprep.subr.mxu0 0.0
    %102 = vmatpush1.msra.mxu0 0.0
    %103 = vmatprep.subr.mxu0 0.0
    %104 = vmatpush1.msra.mxu0 0.0
    %105 = vmatprep.subr.mxu0 0.0
    %106 = vmatpush1.msra.mxu0 0.0
    %107 = vmatprep.mubr.f32.mxu0 0.0
    %v108 = vand.u32 %v30, 4294901760
    %v109 = vsub.f32 %v30, %v108
    %v110 = vand.u32 %v109, 4294901760
    %v111 = vsub.f32 %v109, %v110
    %v112 = vand.u32 %v111, 4294901760
    %113 = vmatmul.mubr.f32.gmra.mrb[0].mxu0 %v112
    %v114 = vpop.f32.mrb[0].mxu0
    %v115 = vadd.f32 %v27, %v114
    %v116 = vpop.f32.mrb[0].mxu0
    %117 = vmatprep.mubr.f32.mxu0 0.0
    %v118 = vand.u32 %v33, 4294901760
    %v119 = vsub.f32 %v33, %v118
    %v120 = vand.u32 %v119, 4294901760
    %v121 = vsub.f32 %v119, %v120
    %v122 = vand.u32 %v121, 4294901760
    %123 = vmatmul.mubr.f32.gmra.mrb[0].mxu0 %v122
    %v124 = vpop.f32.mrb[0].mxu0
    %v125 = vadd.f32 %v27, %v124
    %v126 = vpop.f32.mrb[0].mxu0
    %127 = vmatprep.mubr.f32.mxu0 0.0
    %v128 = vand.u32 %v36, 4294901760
    %v129 = vsub.f32 %v36, %v128
    %v130 = vand.u32 %v129, 4294901760
    %v131 = vsub.f32 %v129, %v130
    %v132 = vand.u32 %v131, 4294901760
    %133 = vmatmul.mubr.f32.gmra.mrb[0].mxu0 %v132
    %v134 = vpop.f32.mrb[0].mxu0
    %v135 = vadd.f32 %v27, %v134
    %v136 = vpop.f32.mrb[0].mxu0
    %137 = vdwg.mxu0
    %138 = vmatprep.subr.mxu0 0.0
    %v139 = vand.u32 %v40, 4294901760
    %v140 = vsub.f32 %v40, %v139
    %v141 = vand.u32 %v140, 4294901760
    %v142 = vsub.f32 %v140, %v141
    %v143 = vand.u32 %v142, 4294901760
    %144 = vmatpush1.msra.mxu0 %v143
    %145 = vmatprep.subr.mxu0 0.0
    %146 = vmatpush1.msra.mxu0 0.0
    %147 = vmatprep.subr.mxu0 0.0
    %148 = vmatpush1.msra.mxu0 0.0
    %149 = vmatprep.subr.mxu0 0.0
    %150 = vmatpush1.msra.mxu0 0.0
    %151 = vmatprep.subr.mxu0 0.0
    %152 = vmatpush1.msra.mxu0 0.0
    %153 = vmatprep.subr.mxu0 0.0
    %154 = vmatpush1.msra.mxu0 0.0
    %155 = vmatprep.subr.mxu0 0.0
    %156 = vmatpush1.msra.mxu0 0.0
    %157 = vmatprep.subr.mxu0 0.0
    %158 = vmatpush1.msra.mxu0 0.0
    %159 = vmatprep.subr.mxu0 0.0
    %160 = vmatpush1.msra.mxu0 0.0
    %161 = vmatprep.subr.mxu0 0.0
    %162 = vmatpush1.msra.mxu0 0.0
    %163 = vmatprep.subr.mxu0 0.0
    %164 = vmatpush1.msra.mxu0 0.0
    %165 = vmatprep.subr.mxu0 0.0
    %166 = vmatpush1.msra.mxu0 0.0
    %167 = vmatprep.subr.mxu0 0.0
    %168 = vmatpush1.msra.mxu0 0.0
    %169 = vmatprep.subr.mxu0 0.0
    %170 = vmatpush1.msra.mxu0 0.0
    %171 = vmatprep.subr.mxu0 0.0
    %172 = vmatpush1.msra.mxu0 0.0
    %173 = vmatprep.subr.mxu0 0.0
    %174 = vmatpush1.msra.mxu0 0.0
    %175 = vmatprep.subr.mxu0 0.0
    %176 = vmatpush1.msra.mxu0 0.0
    %177 = vmatprep.subr.mxu0 0.0
    %178 = vmatpush1.msra.mxu0 0.0
    %179 = vmatprep.subr.mxu0 0.0
    %180 = vmatpush1.msra.mxu0 0.0
    %181 = vmatprep.subr.mxu0 0.0
    %182 = vmatpush1.msra.mxu0 0.0
    %183 = vmatprep.subr.mxu0 0.0
    %184 = vmatpush1.msra.mxu0 0.0
    %185 = vmatprep.subr.mxu0 0.0
    %186 = vmatpush1.msra.mxu0 0.0
    %187 = vmatprep.subr.mxu0 0.0
    %188 = vmatpush1.msra.mxu0 0.0
    %189 = vmatprep.subr.mxu0 0.0
    %190 = vmatpush1.msra.mxu0 0.0
    %191 = vmatprep.subr.mxu0 0.0
    %192 = vmatpush1.msra.mxu0 0.0
    %193 = vmatprep.subr.mxu0 0.0
    %194 = vmatpush1.msra.mxu0 0.0
    %195 = vmatprep.subr.mxu0 0.0
    %196 = vmatpush1.msra.mxu0 0.0
    %197 = vmatprep.subr.mxu0 0.0
    %198 = vmatpush1.msra.mxu0 0.0
    %199 = vmatprep.subr.mxu0 0.0
    %200 = vmatpush1.msra.mxu0 0.0
    %201 = vmatprep.subr.mxu0 0.0
    %202 = vmatpush1.msra.mxu0 0.0
    %203 = vmatprep.subr.mxu0 0.0
    %204 = vmatpush1.msra.mxu0 0.0
    %205 = vmatprep.subr.mxu0 0.0
    %206 = vmatpush1.msra.mxu0 0.0
    %207 = vmatprep.mubr.f32.mxu0 0.0
    %v208 = vand.u32 %v30, 4294901760
    %209 = vmatmul.mubr.f32.gmra.mrb[0].mxu0 %v208
    %v210 = vpop.f32.mrb[0].mxu0
    %v211 = vadd.f32 %v115, %v210
    %v212 = vpop.f32.mrb[0].mxu0
    %213 = vmatprep.mubr.f32.mxu0 0.0
    %v214 = vand.u32 %v33, 4294901760
    %215 = vmatmul.mubr.f32.gmra.mrb[0].mxu0 %v214
    %v216 = vpop.f32.mrb[0].mxu0
    %v217 = vadd.f32 %v125, %v216
    %v218 = vpop.f32.mrb[0].mxu0
    %219 = vmatprep.mubr.f32.mxu0 0.0
    %v220 = vand.u32 %v36, 4294901760
    %221 = vmatmul.mubr.f32.gmra.mrb[0].mxu0 %v220
    %v222 = vpop.f32.mrb[0].mxu0
    %v223 = vadd.f32 %v135, %v222
    %v224 = vpop.f32.mrb[0].mxu0
    %225 = vdwg.mxu0
    %226 = vmatprep.subr.mxu0 0.0
    %v227 = vand.u32 %v40, 4294901760
    %v228 = vsub.f32 %v40, %v227
    %229 = vmatpush1.msra.mxu0 %v228
    %230 = vmatprep.subr.mxu0 0.0
    %231 = vmatpush1.msra.mxu0 0.0
    %232 = vmatprep.subr.mxu0 0.0
    %233 = vmatpush1.msra.mxu0 0.0
    %234 = vmatprep.subr.mxu0 0.0
    %235 = vmatpush1.msra.mxu0 0.0
    %236 = vmatprep.subr.mxu0 0.0
    %237 = vmatpush1.msra.mxu0 0.0
    %238 = vmatprep.subr.mxu0 0.0
    %239 = vmatpush1.msra.mxu0 0.0
    %240 = vmatprep.subr.mxu0 0.0
    %241 = vmatpush1.msra.mxu0 0.0
    %242 = vmatprep.subr.mxu0 0.0
    %243 = vmatpush1.msra.mxu0 0.0
    %244 = vmatprep.subr.mxu0 0.0
    %245 = vmatpush1.msra.mxu0 0.0
    %246 = vmatprep.subr.mxu0 0.0
    %247 = vmatpush1.msra.mxu0 0.0
    %248 = vmatprep.subr.mxu0 0.0
    %249 = vmatpush1.msra.mxu0 0.0
    %250 = vmatprep.subr.mxu0 0.0
    %251 = vmatpush1.msra.mxu0 0.0
    %252 = vmatprep.subr.mxu0 0.0
    %253 = vmatpush1.msra.mxu0 0.0
    %254 = vmatprep.subr.mxu0 0.0
    %255 = vmatpush1.msra.mxu0 0.0
    %256 = vmatprep.subr.mxu0 0.0
    %257 = vmatpush1.msra.mxu0 0.0
    %258 = vmatprep.subr.mxu0 0.0
    %259 = vmatpush1.msra.mxu0 0.0
    %260 = vmatprep.subr.mxu0 0.0
    %261 = vmatpush1.msra.mxu0 0.0
    %262 = vmatprep.subr.mxu0 0.0
    %263 = vmatpush1.msra.mxu0 0.0
    %264 = vmatprep.subr.mxu0 0.0
    %265 = vmatpush1.msra.mxu0 0.0
    %266 = vmatprep.subr.mxu0 0.0
    %267 = vmatpush1.msra.mxu0 0.0
    %268 = vmatprep.subr.mxu0 0.0
    %269 = vmatpush1.msra.mxu0 0.0
    %270 = vmatprep.subr.mxu0 0.0
    %271 = vmatpush1.msra.mxu0 0.0
    %272 = vmatprep.subr.mxu0 0.0
    %273 = vmatpush1.msra.mxu0 0.0
    %274 = vmatprep.subr.mxu0 0.0
    %275 = vmatpush1.msra.mxu0 0.0
    %276 = vmatprep.subr.mxu0 0.0
    %277 = vmatpush1.msra.mxu0 0.0
    %278 = vmatprep.subr.mxu0 0.0
    %279 = vmatpush1.msra.mxu0 0.0
    %280 = vmatprep.subr.mxu0 0.0
    %281 = vmatpush1.msra.mxu0 0.0
    %282 = vmatprep.subr.mxu0 0.0
    %283 = vmatpush1.msra.mxu0 0.0
    %284 = vmatprep.subr.mxu0 0.0
    %285 = vmatpush1.msra.mxu0 0.0
    %286 = vmatprep.subr.mxu0 0.0
    %287 = vmatpush1.msra.mxu0 0.0
    %288 = vmatprep.subr.mxu0 0.0
    %289 = vmatpush1.msra.mxu0 0.0
    %290 = vmatprep.subr.mxu0 0.0
    %291 = vmatpush1.msra.mxu0 0.0
    %292 = vmatprep.mubr.f32.mxu0 0.0
    %v293 = vand.u32 %v30, 4294901760
    %v294 = vsub.f32 %v30, %v293
    %295 = vmatmul.mubr.f32.gmra.mrb[0].mxu0 %v294
    %v296 = vpop.f32.mrb[0].mxu0
    %v297 = vadd.f32 %v211, %v296
    %v298 = vpop.f32.mrb[0].mxu0
    %299 = vmatprep.mubr.f32.mxu0 0.0
    %v300 = vand.u32 %v33, 4294901760
    %v301 = vsub.f32 %v33, %v300
    %302 = vmatmul.mubr.f32.gmra.mrb[0].mxu0 %v301
    %v303 = vpop.f32.mrb[0].mxu0
    %v304 = vadd.f32 %v217, %v303
    %v305 = vpop.f32.mrb[0].mxu0
    %306 = vmatprep.mubr.f32.mxu0 0.0
    %v307 = vand.u32 %v36, 4294901760
    %v308 = vsub.f32 %v36, %v307
    %309 = vmatmul.mubr.f32.gmra.mrb[0].mxu0 %v308
    %v310 = vpop.f32.mrb[0].mxu0
    %v311 = vadd.f32 %v223, %v310
    %v312 = vpop.f32.mrb[0].mxu0
    %313 = vdwg.mxu0
    %314 = vmatprep.subr.mxu0 0.0
    %v315 = vand.u32 %v40, 4294901760
    %316 = vmatpush1.msra.mxu0 %v315
    %317 = vmatprep.subr.mxu0 0.0
    %318 = vmatpush1.msra.mxu0 0.0
    %319 = vmatprep.subr.mxu0 0.0
    %320 = vmatpush1.msra.mxu0 0.0
    %321 = vmatprep.subr.mxu0 0.0
    %322 = vmatpush1.msra.mxu0 0.0
    %323 = vmatprep.subr.mxu0 0.0
    %324 = vmatpush1.msra.mxu0 0.0
    %325 = vmatprep.subr.mxu0 0.0
    %326 = vmatpush1.msra.mxu0 0.0
    %327 = vmatprep.subr.mxu0 0.0
    %328 = vmatpush1.msra.mxu0 0.0
    %329 = vmatprep.subr.mxu0 0.0
    %330 = vmatpush1.msra.mxu0 0.0
    %331 = vmatprep.subr.mxu0 0.0
    %332 = vmatpush1.msra.mxu0 0.0
    %333 = vmatprep.subr.mxu0 0.0
    %334 = vmatpush1.msra.mxu0 0.0
    %335 = vmatprep.subr.mxu0 0.0
    %336 = vmatpush1.msra.mxu0 0.0
    %337 = vmatprep.subr.mxu0 0.0
    %338 = vmatpush1.msra.mxu0 0.0
    %339 = vmatprep.subr.mxu0 0.0
    %340 = vmatpush1.msra.mxu0 0.0
    %341 = vmatprep.subr.mxu0 0.0
    %342 = vmatpush1.msra.mxu0 0.0
    %343 = vmatprep.subr.mxu0 0.0
    %344 = vmatpush1.msra.mxu0 0.0
    %345 = vmatprep.subr.mxu0 0.0
    %346 = vmatpush1.msra.mxu0 0.0
    %347 = vmatprep.subr.mxu0 0.0
    %348 = vmatpush1.msra.mxu0 0.0
    %349 = vmatprep.subr.mxu0 0.0
    %350 = vmatpush1.msra.mxu0 0.0
    %351 = vmatprep.subr.mxu0 0.0
    %352 = vmatpush1.msra.mxu0 0.0
    %353 = vmatprep.subr.mxu0 0.0
    %354 = vmatpush1.msra.mxu0 0.0
    %355 = vmatprep.subr.mxu0 0.0
    %356 = vmatpush1.msra.mxu0 0.0
    %357 = vmatprep.subr.mxu0 0.0
    %358 = vmatpush1.msra.mxu0 0.0
    %359 = vmatprep.subr.mxu0 0.0
    %360 = vmatpush1.msra.mxu0 0.0
    %361 = vmatprep.subr.mxu0 0.0
    %362 = vmatpush1.msra.mxu0 0.0
    %363 = vmatprep.subr.mxu0 0.0
    %364 = vmatpush1.msra.mxu0 0.0
    %365 = vmatprep.subr.mxu0 0.0
    %366 = vmatpush1.msra.mxu0 0.0
    %367 = vmatprep.subr.mxu0 0.0
    %368 = vmatpush1.msra.mxu0 0.0
    %369 = vmatprep.subr.mxu0 0.0
    %370 = vmatpush1.msra.mxu0 0.0
    %371 = vmatprep.subr.mxu0 0.0
    %372 = vmatpush1.msra.mxu0 0.0
    %373 = vmatprep.subr.mxu0 0.0
    %374 = vmatpush1.msra.mxu0 0.0
    %375 = vmatprep.subr.mxu0 0.0
    %376 = vmatpush1.msra.mxu0 0.0
    %377 = vmatprep.subr.mxu0 0.0
    %378 = vmatpush1.msra.mxu0 0.0
    %379 = vmatprep.mubr.f32.mxu0 0.0
    %v380 = vand.u32 %v30, 4294901760
    %v381 = vsub.f32 %v30, %v380
    %v382 = vand.u32 %v381, 4294901760
    %383 = vmatmul.mubr.f32.gmra.mrb[0].mxu0 %v382
    %v384 = vpop.f32.mrb[0].mxu0
    %v385 = vadd.f32 %v297, %v384
    %v386 = vpop.f32.mrb[0].mxu0
    %387 = vmatprep.mubr.f32.mxu0 0.0
    %v388 = vand.u32 %v33, 4294901760
    %v389 = vsub.f32 %v33, %v388
    %v390 = vand.u32 %v389, 4294901760
    %391 = vmatmul.mubr.f32.gmra.mrb[0].mxu0 %v390
    %v392 = vpop.f32.mrb[0].mxu0
    %v393 = vadd.f32 %v304, %v392
    %v394 = vpop.f32.mrb[0].mxu0
    %395 = vmatprep.mubr.f32.mxu0 0.0
    %v396 = vand.u32 %v36, 4294901760
    %v397 = vsub.f32 %v36, %v396
    %v398 = vand.u32 %v397, 4294901760
    %399 = vmatmul.mubr.f32.gmra.mrb[0].mxu0 %v398
    %v400 = vpop.f32.mrb[0].mxu0
    %v401 = vadd.f32 %v311, %v400
    %v402 = vpop.f32.mrb[0].mxu0
    %403 = vdwg.mxu0
    %404 = vmatprep.subr.mxu0 0.0
    %v405 = vand.u32 %v40, 4294901760
    %v406 = vsub.f32 %v40, %v405
    %v407 = vand.u32 %v406, 4294901760
    %408 = vmatpush1.msra.mxu0 %v407
    %409 = vmatprep.subr.mxu0 0.0
    %410 = vmatpush1.msra.mxu0 0.0
    %411 = vmatprep.subr.mxu0 0.0
    %412 = vmatpush1.msra.mxu0 0.0
    %413 = vmatprep.subr.mxu0 0.0
    %414 = vmatpush1.msra.mxu0 0.0
    %415 = vmatprep.subr.mxu0 0.0
    %416 = vmatpush1.msra.mxu0 0.0
    %417 = vmatprep.subr.mxu0 0.0
    %418 = vmatpush1.msra.mxu0 0.0
    %419 = vmatprep.subr.mxu0 0.0
    %420 = vmatpush1.msra.mxu0 0.0
    %421 = vmatprep.subr.mxu0 0.0
    %422 = vmatpush1.msra.mxu0 0.0
    %423 = vmatprep.subr.mxu0 0.0
    %424 = vmatpush1.msra.mxu0 0.0
    %425 = vmatprep.subr.mxu0 0.0
    %426 = vmatpush1.msra.mxu0 0.0
    %427 = vmatprep.subr.mxu0 0.0
    %428 = vmatpush1.msra.mxu0 0.0
    %429 = vmatprep.subr.mxu0 0.0
    %430 = vmatpush1.msra.mxu0 0.0
    %431 = vmatprep.subr.mxu0 0.0
    %432 = vmatpush1.msra.mxu0 0.0
    %433 = vmatprep.subr.mxu0 0.0
    %434 = vmatpush1.msra.mxu0 0.0
    %435 = vmatprep.subr.mxu0 0.0
    %436 = vmatpush1.msra.mxu0 0.0
    %437 = vmatprep.subr.mxu0 0.0
    %438 = vmatpush1.msra.mxu0 0.0
    %439 = vmatprep.subr.mxu0 0.0
    %440 = vmatpush1.msra.mxu0 0.0
    %441 = vmatprep.subr.mxu0 0.0
    %442 = vmatpush1.msra.mxu0 0.0
    %443 = vmatprep.subr.mxu0 0.0
    %444 = vmatpush1.msra.mxu0 0.0
    %445 = vmatprep.subr.mxu0 0.0
    %446 = vmatpush1.msra.mxu0 0.0
    %447 = vmatprep.subr.mxu0 0.0
    %448 = vmatpush1.msra.mxu0 0.0
    %449 = vmatprep.subr.mxu0 0.0
    %450 = vmatpush1.msra.mxu0 0.0
    %451 = vmatprep.subr.mxu0 0.0
    %452 = vmatpush1.msra.mxu0 0.0
    %453 = vmatprep.subr.mxu0 0.0
    %454 = vmatpush1.msra.mxu0 0.0
    %455 = vmatprep.subr.mxu0 0.0
    %456 = vmatpush1.msra.mxu0 0.0
    %457 = vmatprep.subr.mxu0 0.0
    %458 = vmatpush1.msra.mxu0 0.0
    %459 = vmatprep.subr.mxu0 0.0
    %460 = vmatpush1.msra.mxu0 0.0
    %461 = vmatprep.subr.mxu0 0.0
    %462 = vmatpush1.msra.mxu0 0.0
    %463 = vmatprep.subr.mxu0 0.0
    %464 = vmatpush1.msra.mxu0 0.0
    %465 = vmatprep.subr.mxu0 0.0
    %466 = vmatpush1.msra.mxu0 0.0
    %467 = vmatprep.subr.mxu0 0.0
    %468 = vmatpush1.msra.mxu0 0.0
    %469 = vmatprep.subr.mxu0 0.0
    %470 = vmatpush1.msra.mxu0 0.0
    %471 = vmatprep.mubr.f32.mxu0 0.0
    %v472 = vand.u32 %v30, 4294901760
    %473 = vmatmul.mubr.f32.gmra.mrb[0].mxu0 %v472
    %v474 = vpop.f32.mrb[0].mxu0
    %v475 = vadd.f32 %v385, %v474
    %v476 = vpop.f32.mrb[0].mxu0
    %477 = vmatprep.mubr.f32.mxu0 0.0
    %v478 = vand.u32 %v33, 4294901760
    %479 = vmatmul.mubr.f32.gmra.mrb[0].mxu0 %v478
    %v480 = vpop.f32.mrb[0].mxu0
    %v481 = vadd.f32 %v393, %v480
    %v482 = vpop.f32.mrb[0].mxu0
    %483 = vmatprep.mubr.f32.mxu0 0.0
    %v484 = vand.u32 %v36, 4294901760
    %485 = vmatmul.mubr.f32.gmra.mrb[0].mxu0 %v484
    %v486 = vpop.f32.mrb[0].mxu0
    %v487 = vadd.f32 %v401, %v486
    %v488 = vpop.f32.mrb[0].mxu0
    %489 = vdwg.mxu0
    %490 = vmatprep.subr.mxu0 0.0
    %v491 = vand.u32 %v40, 4294901760
    %492 = vmatpush1.msra.mxu0 %v491
    %493 = vmatprep.subr.mxu0 0.0
    %494 = vmatpush1.msra.mxu0 0.0
    %495 = vmatprep.subr.mxu0 0.0
    %496 = vmatpush1.msra.mxu0 0.0
    %497 = vmatprep.subr.mxu0 0.0
    %498 = vmatpush1.msra.mxu0 0.0
    %499 = vmatprep.subr.mxu0 0.0
    %500 = vmatpush1.msra.mxu0 0.0
    %501 = vmatprep.subr.mxu0 0.0
    %502 = vmatpush1.msra.mxu0 0.0
    %503 = vmatprep.subr.mxu0 0.0
    %504 = vmatpush1.msra.mxu0 0.0
    %505 = vmatprep.subr.mxu0 0.0
    %506 = vmatpush1.msra.mxu0 0.0
    %507 = vmatprep.subr.mxu0 0.0
    %508 = vmatpush1.msra.mxu0 0.0
    %509 = vmatprep.subr.mxu0 0.0
    %510 = vmatpush1.msra.mxu0 0.0
    %511 = vmatprep.subr.mxu0 0.0
    %512 = vmatpush1.msra.mxu0 0.0
    %513 = vmatprep.subr.mxu0 0.0
    %514 = vmatpush1.msra.mxu0 0.0
    %515 = vmatprep.subr.mxu0 0.0
    %516 = vmatpush1.msra.mxu0 0.0
    %517 = vmatprep.subr.mxu0 0.0
    %518 = vmatpush1.msra.mxu0 0.0
    %519 = vmatprep.subr.mxu0 0.0
    %520 = vmatpush1.msra.mxu0 0.0
    %521 = vmatprep.subr.mxu0 0.0
    %522 = vmatpush1.msra.mxu0 0.0
    %523 = vmatprep.subr.mxu0 0.0
    %524 = vmatpush1.msra.mxu0 0.0
    %525 = vmatprep.subr.mxu0 0.0
    %526 = vmatpush1.msra.mxu0 0.0
    %527 = vmatprep.subr.mxu0 0.0
    %528 = vmatpush1.msra.mxu0 0.0
    %529 = vmatprep.subr.mxu0 0.0
    %530 = vmatpush1.msra.mxu0 0.0
    %531 = vmatprep.subr.mxu0 0.0
    %532 = vmatpush1.msra.mxu0 0.0
    %533 = vmatprep.subr.mxu0 0.0
    %534 = vmatpush1.msra.mxu0 0.0
    %535 = vmatprep.subr.mxu0 0.0
    %536 = vmatpush1.msra.mxu0 0.0
    %537 = vmatprep.subr.mxu0 0.0
    %538 = vmatpush1.msra.mxu0 0.0
    %539 = vmatprep.subr.mxu0 0.0
    %540 = vmatpush1.msra.mxu0 0.0
    %541 = vmatprep.subr.mxu0 0.0
    %542 = vmatpush1.msra.mxu0 0.0
    %543 = vmatprep.subr.mxu0 0.0
    %544 = vmatpush1.msra.mxu0 0.0
    %545 = vmatprep.subr.mxu0 0.0
    %546 = vmatpush1.msra.mxu0 0.0
    %547 = vmatprep.subr.mxu0 0.0
    %548 = vmatpush1.msra.mxu0 0.0
    %549 = vmatprep.subr.mxu0 0.0
    %550 = vmatpush1.msra.mxu0 0.0
    %551 = vmatprep.subr.mxu0 0.0
    %552 = vmatpush1.msra.mxu0 0.0
    %553 = vmatprep.subr.mxu0 0.0
    %554 = vmatpush1.msra.mxu0 0.0
    %555 = vmatprep.mubr.f32.mxu0 0.0
    %v556 = vand.u32 %v30, 4294901760
    %557 = vmatmul.mubr.f32.gmra.mrb[0].mxu0 %v556
    %v558 = vpop.f32.mrb[0].mxu0
    %v559 = vadd.f32 %v475, %v558
    %v560 = vpop.f32.mrb[0].mxu0
    %561 = vmatprep.mubr.f32.mxu0 0.0
    %v562 = vand.u32 %v33, 4294901760
    %563 = vmatmul.mubr.f32.gmra.mrb[0].mxu0 %v562
    %v564 = vpop.f32.mrb[0].mxu0
    %v565 = vadd.f32 %v481, %v564
    %v566 = vpop.f32.mrb[0].mxu0
    %567 = vmatprep.mubr.f32.mxu0 0.0
    %v568 = vand.u32 %v36, 4294901760
    %569 = vmatmul.mubr.f32.gmra.mrb[0].mxu0 %v568
    %v570 = vpop.f32.mrb[0].mxu0
    %v571 = vadd.f32 %v487, %v570
    %v572 = vpop.f32.mrb[0].mxu0
    %573 = vdwg.mxu0
    %v574 = vlaneseq
    %v575 = vshrl.u32 %v574, 7
    %v576 = vsub.s32 0, %v575
    %v577 = vrot.slane %v21, %v576
    %vm578 = vcmask 39936
    %v580 = vsel %vm578, %v559, 0
    %v583 = vsel %vm578, %v565, 0
    %v586 = vsel %vm578, %v571, 0
    %vm588 = vcmask 1044480
    %v590 = vsel %vm588, %v20, 0
    %592 = vmatprep.subr.mxu0 0.0
    %v593 = vand.u32 %v590, 4294901760
    %594 = vmatpush1.msra.mxu0 %v593
    %595 = vmatprep.subr.mxu0 0.0
    %596 = vmatpush1.msra.mxu0 0.0
    %597 = vmatprep.subr.mxu0 0.0
    %598 = vmatpush1.msra.mxu0 0.0
    %599 = vmatprep.subr.mxu0 0.0
    %600 = vmatpush1.msra.mxu0 0.0
    %601 = vmatprep.subr.mxu0 0.0
    %602 = vmatpush1.msra.mxu0 0.0
    %603 = vmatprep.subr.mxu0 0.0
    %604 = vmatpush1.msra.mxu0 0.0
    %605 = vmatprep.subr.mxu0 0.0
    %606 = vmatpush1.msra.mxu0 0.0
    %607 = vmatprep.subr.mxu0 0.0
    %608 = vmatpush1.msra.mxu0 0.0
    %609 = vmatprep.subr.mxu0 0.0
    %610 = vmatpush1.msra.mxu0 0.0
    %611 = vmatprep.subr.mxu0 0.0
    %612 = vmatpush1.msra.mxu0 0.0
    %613 = vmatprep.subr.mxu0 0.0
    %614 = vmatpush1.msra.mxu0 0.0
    %615 = vmatprep.subr.mxu0 0.0
    %616 = vmatpush1.msra.mxu0 0.0
    %617 = vmatprep.subr.mxu0 0.0
    %618 = vmatpush1.msra.mxu0 0.0
    %619 = vmatprep.subr.mxu0 0.0
    %620 = vmatpush1.msra.mxu0 0.0
    %621 = vmatprep.subr.mxu0 0.0
    %622 = vmatpush1.msra.mxu0 0.0
    %623 = vmatprep.subr.mxu0 0.0
    %624 = vmatpush1.msra.mxu0 0.0
    %625 = vmatprep.subr.mxu0 0.0
    %626 = vmatpush1.msra.mxu0 0.0
    %627 = vmatprep.subr.mxu0 0.0
    %628 = vmatpush1.msra.mxu0 0.0
    %629 = vmatprep.subr.mxu0 0.0
    %630 = vmatpush1.msra.mxu0 0.0
    %631 = vmatprep.subr.mxu0 0.0
    %632 = vmatpush1.msra.mxu0 0.0
    %633 = vmatprep.subr.mxu0 0.0
    %634 = vmatpush1.msra.mxu0 0.0
    %635 = vmatprep.subr.mxu0 0.0
    %636 = vmatpush1.msra.mxu0 0.0
    %637 = vmatprep.subr.mxu0 0.0
    %638 = vmatpush1.msra.mxu0 0.0
    %639 = vmatprep.subr.mxu0 0.0
    %640 = vmatpush1.msra.mxu0 0.0
    %641 = vmatprep.subr.mxu0 0.0
    %642 = vmatpush1.msra.mxu0 0.0
    %643 = vmatprep.subr.mxu0 0.0
    %644 = vmatpush1.msra.mxu0 0.0
    %645 = vmatprep.subr.mxu0 0.0
    %646 = vmatpush1.msra.mxu0 0.0
    %647 = vmatprep.subr.mxu0 0.0
    %648 = vmatpush1.msra.mxu0 0.0
    %649 = vmatprep.subr.mxu0 0.0
    %650 = vmatpush1.msra.mxu0 0.0
    %651 = vmatprep.subr.mxu0 0.0
    %652 = vmatpush1.msra.mxu0 0.0
    %653 = vmatprep.subr.mxu0 0.0
    %654 = vmatpush1.msra.mxu0 0.0
    %655 = vmatprep.subr.mxu0 0.0
    %656 = vmatpush1.msra.mxu0 0.0
    %657 = vmatprep.mubr.f32.mxu0 0.0
    %v658 = vand.u32 %v580, 4294901760
    %v659 = vsub.f32 %v580, %v658
    %v660 = vand.u32 %v659, 4294901760
    %v661 = vsub.f32 %v659, %v660
    %v662 = vand.u32 %v661, 4294901760
    %663 = vmatmul.mubr.f32.gmra.mrb[0].mxu0 %v662
    %v664 = vpop.f32.mrb[0].mxu0
    %v665 = vadd.f32 %v577, %v664
    %v666 = vpop.f32.mrb[0].mxu0
    %667 = vmatprep.mubr.f32.mxu0 0.0
    %v668 = vand.u32 %v583, 4294901760
    %v669 = vsub.f32 %v583, %v668
    %v670 = vand.u32 %v669, 4294901760
    %v671 = vsub.f32 %v669, %v670
    %v672 = vand.u32 %v671, 4294901760
    %673 = vmatmul.mubr.f32.gmra.mrb[0].mxu0 %v672
    %v674 = vpop.f32.mrb[0].mxu0
    %v675 = vadd.f32 %v577, %v674
    %v676 = vpop.f32.mrb[0].mxu0
    %677 = vmatprep.mubr.f32.mxu0 0.0
    %v678 = vand.u32 %v586, 4294901760
    %v679 = vsub.f32 %v586, %v678
    %v680 = vand.u32 %v679, 4294901760
    %v681 = vsub.f32 %v679, %v680
    %v682 = vand.u32 %v681, 4294901760
    %683 = vmatmul.mubr.f32.gmra.mrb[0].mxu0 %v682
    %v684 = vpop.f32.mrb[0].mxu0
    %v685 = vadd.f32 %v577, %v684
    %v686 = vpop.f32.mrb[0].mxu0
    %687 = vdwg.mxu0
    %688 = vmatprep.subr.mxu0 0.0
    %v689 = vand.u32 %v590, 4294901760
    %v690 = vsub.f32 %v590, %v689
    %v691 = vand.u32 %v690, 4294901760
    %v692 = vsub.f32 %v690, %v691
    %v693 = vand.u32 %v692, 4294901760
    %694 = vmatpush1.msra.mxu0 %v693
    %695 = vmatprep.subr.mxu0 0.0
    %696 = vmatpush1.msra.mxu0 0.0
    %697 = vmatprep.subr.mxu0 0.0
    %698 = vmatpush1.msra.mxu0 0.0
    %699 = vmatprep.subr.mxu0 0.0
    %700 = vmatpush1.msra.mxu0 0.0
    %701 = vmatprep.subr.mxu0 0.0
    %702 = vmatpush1.msra.mxu0 0.0
    %703 = vmatprep.subr.mxu0 0.0
    %704 = vmatpush1.msra.mxu0 0.0
    %705 = vmatprep.subr.mxu0 0.0
    %706 = vmatpush1.msra.mxu0 0.0
    %707 = vmatprep.subr.mxu0 0.0
    %708 = vmatpush1.msra.mxu0 0.0
    %709 = vmatprep.subr.mxu0 0.0
    %710 = vmatpush1.msra.mxu0 0.0
    %711 = vmatprep.subr.mxu0 0.0
    %712 = vmatpush1.msra.mxu0 0.0
    %713 = vmatprep.subr.mxu0 0.0
    %714 = vmatpush1.msra.mxu0 0.0
    %715 = vmatprep.subr.mxu0 0.0
    %716 = vmatpush1.msra.mxu0 0.0
    %717 = vmatprep.subr.mxu0 0.0
    %718 = vmatpush1.msra.mxu0 0.0
    %719 = vmatprep.subr.mxu0 0.0
    %720 = vmatpush1.msra.mxu0 0.0
    %721 = vmatprep.subr.mxu0 0.0
    %722 = vmatpush1.msra.mxu0 0.0
    %723 = vmatprep.subr.mxu0 0.0
    %724 = vmatpush1.msra.mxu0 0.0
    %725 = vmatprep.subr.mxu0 0.0
    %726 = vmatpush1.msra.mxu0 0.0
    %727 = vmatprep.subr.mxu0 0.0
    %728 = vmatpush1.msra.mxu0 0.0
    %729 = vmatprep.subr.mxu0 0.0
    %730 = vmatpush1.msra.mxu0 0.0
    %731 = vmatprep.subr.mxu0 0.0
    %732 = vmatpush1.msra.mxu0 0.0
    %733 = vmatprep.subr.mxu0 0.0
    %734 = vmatpush1.msra.mxu0 0.0
    %735 = vmatprep.subr.mxu0 0.0
    %736 = vmatpush1.msra.mxu0 0.0
    %737 = vmatprep.subr.mxu0 0.0
    %738 = vmatpush1.msra.mxu0 0.0
    %739 = vmatprep.subr.mxu0 0.0
    %740 = vmatpush1.msra.mxu0 0.0
    %741 = vmatprep.subr.mxu0 0.0
    %742 = vmatpush1.msra.mxu0 0.0
    %743 = vmatprep.subr.mxu0 0.0
    %744 = vmatpush1.msra.mxu0 0.0
    %745 = vmatprep.subr.mxu0 0.0
    %746 = vmatpush1.msra.mxu0 0.0
    %747 = vmatprep.subr.mxu0 0.0
    %748 = vmatpush1.msra.mxu0 0.0
    %749 = vmatprep.subr.mxu0 0.0
    %750 = vmatpush1.msra.mxu0 0.0
    %751 = vmatprep.subr.mxu0 0.0
    %752 = vmatpush1.msra.mxu0 0.0
    %753 = vmatprep.subr.mxu0 0.0
    %754 = vmatpush1.msra.mxu0 0.0
    %755 = vmatprep.subr.mxu0 0.0
    %756 = vmatpush1.msra.mxu0 0.0
    %757 = vmatprep.mubr.f32.mxu0 0.0
    %v758 = vand.u32 %v580, 4294901760
    %759 = vmatmul.mubr.f32.gmra.mrb[0].mxu0 %v758
    %v760 = vpop.f32.mrb[0].mxu0
    %v761 = vadd.f32 %v665, %v760
    %v762 = vpop.f32.mrb[0].mxu0
    %763 = vmatprep.mubr.f32.mxu0 0.0
    %v764 = vand.u32 %v583, 4294901760
    %765 = vmatmul.mubr.f32.gmra.mrb[0].mxu0 %v764
    %v766 = vpop.f32.mrb[0].mxu0
    %v767 = vadd.f32 %v675, %v766
    %v768 = vpop.f32.mrb[0].mxu0
    %769 = vmatprep.mubr.f32.mxu0 0.0
    %v770 = vand.u32 %v586, 4294901760
    %771 = vmatmul.mubr.f32.gmra.mrb[0].mxu0 %v770
    %v772 = vpop.f32.mrb[0].mxu0
    %v773 = vadd.f32 %v685, %v772
    %v774 = vpop.f32.mrb[0].mxu0
    %775 = vdwg.mxu0
    %776 = vmatprep.subr.mxu0 0.0
    %v777 = vand.u32 %v590, 4294901760
    %v778 = vsub.f32 %v590, %v777
    %779 = vmatpush1.msra.mxu0 %v778
    %780 = vmatprep.subr.mxu0 0.0
    %781 = vmatpush1.msra.mxu0 0.0
    %782 = vmatprep.subr.mxu0 0.0
    %783 = vmatpush1.msra.mxu0 0.0
    %784 = vmatprep.subr.mxu0 0.0
    %785 = vmatpush1.msra.mxu0 0.0
    %786 = vmatprep.subr.mxu0 0.0
    %787 = vmatpush1.msra.mxu0 0.0
    %788 = vmatprep.subr.mxu0 0.0
    %789 = vmatpush1.msra.mxu0 0.0
    %790 = vmatprep.subr.mxu0 0.0
    %791 = vmatpush1.msra.mxu0 0.0
    %792 = vmatprep.subr.mxu0 0.0
    %793 = vmatpush1.msra.mxu0 0.0
    %794 = vmatprep.subr.mxu0 0.0
    %795 = vmatpush1.msra.mxu0 0.0
    %796 = vmatprep.subr.mxu0 0.0
    %797 = vmatpush1.msra.mxu0 0.0
    %798 = vmatprep.subr.mxu0 0.0
    %799 = vmatpush1.msra.mxu0 0.0
    %800 = vmatprep.subr.mxu0 0.0
    %801 = vmatpush1.msra.mxu0 0.0
    %802 = vmatprep.subr.mxu0 0.0
    %803 = vmatpush1.msra.mxu0 0.0
    %804 = vmatprep.subr.mxu0 0.0
    %805 = vmatpush1.msra.mxu0 0.0
    %806 = vmatprep.subr.mxu0 0.0
    %807 = vmatpush1.msra.mxu0 0.0
    %808 = vmatprep.subr.mxu0 0.0
    %809 = vmatpush1.msra.mxu0 0.0
    %810 = vmatprep.subr.mxu0 0.0
    %811 = vmatpush1.msra.mxu0 0.0
    %812 = vmatprep.subr.mxu0 0.0
    %813 = vmatpush1.msra.mxu0 0.0
    %814 = vmatprep.subr.mxu0 0.0
    %815 = vmatpush1.msra.mxu0 0.0
    %816 = vmatprep.subr.mxu0 0.0
    %817 = vmatpush1.msra.mxu0 0.0
    %818 = vmatprep.subr.mxu0 0.0
    %819 = vmatpush1.msra.mxu0 0.0
    %820 = vmatprep.subr.mxu0 0.0
    %821 = vmatpush1.msra.mxu0 0.0
    %822 = vmatprep.subr.mxu0 0.0
    %823 = vmatpush1.msra.mxu0 0.0
    %824 = vmatprep.subr.mxu0 0.0
    %825 = vmatpush1.msra.mxu0 0.0
    %826 = vmatprep.subr.mxu0 0.0
    %827 = vmatpush1.msra.mxu0 0.0
    %828 = vmatprep.subr.mxu0 0.0
    %829 = vmatpush1.msra.mxu0 0.0
    %830 = vmatprep.subr.mxu0 0.0
    %831 = vmatpush1.msra.mxu0 0.0
    %832 = vmatprep.subr.mxu0 0.0
    %833 = vmatpush1.msra.mxu0 0.0
    %834 = vmatprep.subr.mxu0 0.0
    %835 = vmatpush1.msra.mxu0 0.0
    %836 = vmatprep.subr.mxu0 0.0
    %837 = vmatpush1.msra.mxu0 0.0
    %838 = vmatprep.subr.mxu0 0.0
    %839 = vmatpush1.msra.mxu0 0.0
    %840 = vmatprep.subr.mxu0 0.0
    %841 = vmatpush1.msra.mxu0 0.0
    %842 = vmatprep.mubr.f32.mxu0 0.0
    %v843 = vand.u32 %v580, 4294901760
    %v844 = vsub.f32 %v580, %v843
    %845 = vmatmul.mubr.f32.gmra.mrb[0].mxu0 %v844
    %v846 = vpop.f32.mrb[0].mxu0
    %v847 = vadd.f32 %v761, %v846
    %v848 = vpop.f32.mrb[0].mxu0
    %849 = vmatprep.mubr.f32.mxu0 0.0
    %v850 = vand.u32 %v583, 4294901760
    %v851 = vsub.f32 %v583, %v850
    %852 = vmatmul.mubr.f32.gmra.mrb[0].mxu0 %v851
    %v853 = vpop.f32.mrb[0].mxu0
    %v854 = vadd.f32 %v767, %v853
    %v855 = vpop.f32.mrb[0].mxu0
    %856 = vmatprep.mubr.f32.mxu0 0.0
    %v857 = vand.u32 %v586, 4294901760
    %v858 = vsub.f32 %v586, %v857
    %859 = vmatmul.mubr.f32.gmra.mrb[0].mxu0 %v858
    %v860 = vpop.f32.mrb[0].mxu0
    %v861 = vadd.f32 %v773, %v860
    %v862 = vpop.f32.mrb[0].mxu0
    %863 = vdwg.mxu0
    %864 = vmatprep.subr.mxu0 0.0
    %v865 = vand.u32 %v590, 4294901760
    %866 = vmatpush1.msra.mxu0 %v865
    %867 = vmatprep.subr.mxu0 0.0
    %868 = vmatpush1.msra.mxu0 0.0
    %869 = vmatprep.subr.mxu0 0.0
    %870 = vmatpush1.msra.mxu0 0.0
    %871 = vmatprep.subr.mxu0 0.0
    %872 = vmatpush1.msra.mxu0 0.0
    %873 = vmatprep.subr.mxu0 0.0
    %874 = vmatpush1.msra.mxu0 0.0
    %875 = vmatprep.subr.mxu0 0.0
    %876 = vmatpush1.msra.mxu0 0.0
    %877 = vmatprep.subr.mxu0 0.0
    %878 = vmatpush1.msra.mxu0 0.0
    %879 = vmatprep.subr.mxu0 0.0
    %880 = vmatpush1.msra.mxu0 0.0
    %881 = vmatprep.subr.mxu0 0.0
    %882 = vmatpush1.msra.mxu0 0.0
    %883 = vmatprep.subr.mxu0 0.0
    %884 = vmatpush1.msra.mxu0 0.0
    %885 = vmatprep.subr.mxu0 0.0
    %886 = vmatpush1.msra.mxu0 0.0
    %887 = vmatprep.subr.mxu0 0.0
    %888 = vmatpush1.msra.mxu0 0.0
    %889 = vmatprep.subr.mxu0 0.0
    %890 = vmatpush1.msra.mxu0 0.0
    %891 = vmatprep.subr.mxu0 0.0
    %892 = vmatpush1.msra.mxu0 0.0
    %893 = vmatprep.subr.mxu0 0.0
    %894 = vmatpush1.msra.mxu0 0.0
    %895 = vmatprep.subr.mxu0 0.0
    %896 = vmatpush1.msra.mxu0 0.0
    %897 = vmatprep.subr.mxu0 0.0
    %898 = vmatpush1.msra.mxu0 0.0
    %899 = vmatprep.subr.mxu0 0.0
    %900 = vmatpush1.msra.mxu0 0.0
    %901 = vmatprep.subr.mxu0 0.0
    %902 = vmatpush1.msra.mxu0 0.0
    %903 = vmatprep.subr.mxu0 0.0
    %904 = vmatpush1.msra.mxu0 0.0
    %905 = vmatprep.subr.mxu0 0.0
    %906 = vmatpush1.msra.mxu0 0.0
    %907 = vmatprep.subr.mxu0 0.0
    %908 = vmatpush1.msra.mxu0 0.0
    %909 = vmatprep.subr.mxu0 0.0
    %910 = vmatpush1.msra.mxu0 0.0
    %911 = vmatprep.subr.mxu0 0.0
    %912 = vmatpush1.msra.mxu0 0.0
    %913 = vmatprep.subr.mxu0 0.0
    %914 = vmatpush1.msra.mxu0 0.0
    %915 = vmatprep.subr.mxu0 0.0
    %916 = vmatpush1.msra.mxu0 0.0
    %917 = vmatprep.subr.mxu0 0.0
    %918 = vmatpush1.msra.mxu0 0.0
    %919 = vmatprep.subr.mxu0 0.0
    %920 = vmatpush1.msra.mxu0 0.0
    %921 = vmatprep.subr.mxu0 0.0
    %922 = vmatpush1.msra.mxu0 0.0
    %923 = vmatprep.subr.mxu0 0.0
    %924 = vmatpush1.msra.mxu0 0.0
    %925 = vmatprep.subr.mxu0 0.0
    %926 = vmatpush1.msra.mxu0 0.0
    %927 = vmatprep.subr.mxu0 0.0
    %928 = vmatpush1.msra.mxu0 0.0
    %929 = vmatprep.mubr.f32.mxu0 0.0
    %v930 = vand.u32 %v580, 4294901760
    %v931 = vsub.f32 %v580, %v930
    %v932 = vand.u32 %v931, 4294901760
    %933 = vmatmul.mubr.f32.gmra.mrb[0].mxu0 %v932
    %v934 = vpop.f32.mrb[0].mxu0
    %v935 = vadd.f32 %v847, %v934
    %v936 = vpop.f32.mrb[0].mxu0
    %937 = vmatprep.mubr.f32.mxu0 0.0
    %v938 = vand.u32 %v583, 4294901760
    %v939 = vsub.f32 %v583, %v938
    %v940 = vand.u32 %v939, 4294901760
    %941 = vmatmul.mubr.f32.gmra.mrb[0].mxu0 %v940
    %v942 = vpop.f32.mrb[0].mxu0
    %v943 = vadd.f32 %v854, %v942
    %v944 = vpop.f32.mrb[0].mxu0
    %945 = vmatprep.mubr.f32.mxu0 0.0
    %v946 = vand.u32 %v586, 4294901760
    %v947 = vsub.f32 %v586, %v946
    %v948 = vand.u32 %v947, 4294901760
    %949 = vmatmul.mubr.f32.gmra.mrb[0].mxu0 %v948
    %v950 = vpop.f32.mrb[0].mxu0
    %v951 = vadd.f32 %v861, %v950
    %v952 = vpop.f32.mrb[0].mxu0
    %953 = vdwg.mxu0
    %954 = vmatprep.subr.mxu0 0.0
    %v955 = vand.u32 %v590, 4294901760
    %v956 = vsub.f32 %v590, %v955
    %v957 = vand.u32 %v956, 4294901760
    %958 = vmatpush1.msra.mxu0 %v957
    %959 = vmatprep.subr.mxu0 0.0
    %960 = vmatpush1.msra.mxu0 0.0
    %961 = vmatprep.subr.mxu0 0.0
    %962 = vmatpush1.msra.mxu0 0.0
    %963 = vmatprep.subr.mxu0 0.0
    %964 = vmatpush1.msra.mxu0 0.0
    %965 = vmatprep.subr.mxu0 0.0
    %966 = vmatpush1.msra.mxu0 0.0
    %967 = vmatprep.subr.mxu0 0.0
    %968 = vmatpush1.msra.mxu0 0.0
    %969 = vmatprep.subr.mxu0 0.0
    %970 = vmatpush1.msra.mxu0 0.0
    %971 = vmatprep.subr.mxu0 0.0
    %972 = vmatpush1.msra.mxu0 0.0
    %973 = vmatprep.subr.mxu0 0.0
    %974 = vmatpush1.msra.mxu0 0.0
    %975 = vmatprep.subr.mxu0 0.0
    %976 = vmatpush1.msra.mxu0 0.0
    %977 = vmatprep.subr.mxu0 0.0
    %978 = vmatpush1.msra.mxu0 0.0
    %979 = vmatprep.subr.mxu0 0.0
    %980 = vmatpush1.msra.mxu0 0.0
    %981 = vmatprep.subr.mxu0 0.0
    %982 = vmatpush1.msra.mxu0 0.0
    %983 = vmatprep.subr.mxu0 0.0
    %984 = vmatpush1.msra.mxu0 0.0
    %985 = vmatprep.subr.mxu0 0.0
    %986 = vmatpush1.msra.mxu0 0.0
    %987 = vmatprep.subr.mxu0 0.0
    %988 = vmatpush1.msra.mxu0 0.0
    %989 = vmatprep.subr.mxu0 0.0
    %990 = vmatpush1.msra.mxu0 0.0
    %991 = vmatprep.subr.mxu0 0.0
    %992 = vmatpush1.msra.mxu0 0.0
    %993 = vmatprep.subr.mxu0 0.0
    %994 = vmatpush1.msra.mxu0 0.0
    %995 = vmatprep.subr.mxu0 0.0
    %996 = vmatpush1.msra.mxu0 0.0
    %997 = vmatprep.subr.mxu0 0.0
    %998 = vmatpush1.msra.mxu0 0.0
    %999 = vmatprep.subr.mxu0 0.0
    %1000 = vmatpush1.msra.mxu0 0.0
    %1001 = vmatprep.subr.mxu0 0.0
    %1002 = vmatpush1.msra.mxu0 0.0
    %1003 = vmatprep.subr.mxu0 0.0
    %1004 = vmatpush1.msra.mxu0 0.0
    %1005 = vmatprep.subr.mxu0 0.0
    %1006 = vmatpush1.msra.mxu0 0.0
    %1007 = vmatprep.subr.mxu0 0.0
    %1008 = vmatpush1.msra.mxu0 0.0
    %1009 = vmatprep.subr.mxu0 0.0
    %1010 = vmatpush1.msra.mxu0 0.0
    %1011 = vmatprep.subr.mxu0 0.0
    %1012 = vmatpush1.msra.mxu0 0.0
    %1013 = vmatprep.subr.mxu0 0.0
    %1014 = vmatpush1.msra.mxu0 0.0
    %1015 = vmatprep.subr.mxu0 0.0
    %1016 = vmatpush1.msra.mxu0 0.0
    %1017 = vmatprep.subr.mxu0 0.0
    %1018 = vmatpush1.msra.mxu0 0.0
    %1019 = vmatprep.subr.mxu0 0.0
    %1020 = vmatpush1.msra.mxu0 0.0
    %1021 = vmatprep.mubr.f32.mxu0 0.0
    %v1022 = vand.u32 %v580, 4294901760
    %1023 = vmatmul.mubr.f32.gmra.mrb[0].mxu0 %v1022
    %v1024 = vpop.f32.mrb[0].mxu0
    %v1025 = vadd.f32 %v935, %v1024
    %v1026 = vpop.f32.mrb[0].mxu0
    %1027 = vmatprep.mubr.f32.mxu0 0.0
    %v1028 = vand.u32 %v583, 4294901760
    %1029 = vmatmul.mubr.f32.gmra.mrb[0].mxu0 %v1028
    %v1030 = vpop.f32.mrb[0].mxu0
    %v1031 = vadd.f32 %v943, %v1030
    %v1032 = vpop.f32.mrb[0].mxu0
    %1033 = vmatprep.mubr.f32.mxu0 0.0
    %v1034 = vand.u32 %v586, 4294901760
    %1035 = vmatmul.mubr.f32.gmra.mrb[0].mxu0 %v1034
    %v1036 = vpop.f32.mrb[0].mxu0
    %v1037 = vadd.f32 %v951, %v1036
    %v1038 = vpop.f32.mrb[0].mxu0
    %1039 = vdwg.mxu0
    %1040 = vmatprep.subr.mxu0 0.0
    %v1041 = vand.u32 %v590, 4294901760
    %1042 = vmatpush1.msra.mxu0 %v1041
    %1043 = vmatprep.subr.mxu0 0.0
    %1044 = vmatpush1.msra.mxu0 0.0
    %1045 = vmatprep.subr.mxu0 0.0
    %1046 = vmatpush1.msra.mxu0 0.0
    %1047 = vmatprep.subr.mxu0 0.0
    %1048 = vmatpush1.msra.mxu0 0.0
    %1049 = vmatprep.subr.mxu0 0.0
    %1050 = vmatpush1.msra.mxu0 0.0
    %1051 = vmatprep.subr.mxu0 0.0
    %1052 = vmatpush1.msra.mxu0 0.0
    %1053 = vmatprep.subr.mxu0 0.0
    %1054 = vmatpush1.msra.mxu0 0.0
    %1055 = vmatprep.subr.mxu0 0.0
    %1056 = vmatpush1.msra.mxu0 0.0
    %1057 = vmatprep.subr.mxu0 0.0
    %1058 = vmatpush1.msra.mxu0 0.0
    %1059 = vmatprep.subr.mxu0 0.0
    %1060 = vmatpush1.msra.mxu0 0.0
    %1061 = vmatprep.subr.mxu0 0.0
    %1062 = vmatpush1.msra.mxu0 0.0
    %1063 = vmatprep.subr.mxu0 0.0
    %1064 = vmatpush1.msra.mxu0 0.0
    %1065 = vmatprep.subr.mxu0 0.0
    %1066 = vmatpush1.msra.mxu0 0.0
    %1067 = vmatprep.subr.mxu0 0.0
    %1068 = vmatpush1.msra.mxu0 0.0
    %1069 = vmatprep.subr.mxu0 0.0
    %1070 = vmatpush1.msra.mxu0 0.0
    %1071 = vmatprep.subr.mxu0 0.0
    %1072 = vmatpush1.msra.mxu0 0.0
    %1073 = vmatprep.subr.mxu0 0.0
    %1074 = vmatpush1.msra.mxu0 0.0
    %1075 = vmatprep.subr.mxu0 0.0
    %1076 = vmatpush1.msra.mxu0 0.0
    %1077 = vmatprep.subr.mxu0 0.0
    %1078 = vmatpush1.msra.mxu0 0.0
    %1079 = vmatprep.subr.mxu0 0.0
    %1080 = vmatpush1.msra.mxu0 0.0
    %1081 = vmatprep.subr.mxu0 0.0
    %1082 = vmatpush1.msra.mxu0 0.0
    %1083 = vmatprep.subr.mxu0 0.0
    %1084 = vmatpush1.msra.mxu0 0.0
    %1085 = vmatprep.subr.mxu0 0.0
    %1086 = vmatpush1.msra.mxu0 0.0
    %1087 = vmatprep.subr.mxu0 0.0
    %1088 = vmatpush1.msra.mxu0 0.0
    %1089 = vmatprep.subr.mxu0 0.0
    %1090 = vmatpush1.msra.mxu0 0.0
    %1091 = vmatprep.subr.mxu0 0.0
    %1092 = vmatpush1.msra.mxu0 0.0
    %1093 = vmatprep.subr.mxu0 0.0
    %1094 = vmatpush1.msra.mxu0 0.0
    %1095 = vmatprep.subr.mxu0 0.0
    %1096 = vmatpush1.msra.mxu0 0.0
    %1097 = vmatprep.subr.mxu0 0.0
    %1098 = vmatpush1.msra.mxu0 0.0
    %1099 = vmatprep.subr.mxu0 0.0
    %1100 = vmatpush1.msra.mxu0 0.0
    %1101 = vmatprep.subr.mxu0 0.0
    %1102 = vmatpush1.msra.mxu0 0.0
    %1103 = vmatprep.subr.mxu0 0.0
    %1104 = vmatpush1.msra.mxu0 0.0
    %1105 = vmatprep.mubr.f32.mxu0 0.0
    %v1106 = vand.u32 %v580, 4294901760
    %1107 = vmatmul.mubr.f32.gmra.mrb[0].mxu0 %v1106
    %v1108 = vpop.f32.mrb[0].mxu0
    %v1109 = vadd.f32 %v1025, %v1108
    %v1110 = vpop.f32.mrb[0].mxu0
    %1111 = vmatprep.mubr.f32.mxu0 0.0
    %v1112 = vand.u32 %v583, 4294901760
    %1113 = vmatmul.mubr.f32.gmra.mrb[0].mxu0 %v1112
    %v1114 = vpop.f32.mrb[0].mxu0
    %v1115 = vadd.f32 %v1031, %v1114
    %v1116 = vpop.f32.mrb[0].mxu0
    %1117 = vmatprep.mubr.f32.mxu0 0.0
    %v1118 = vand.u32 %v586, 4294901760
    %1119 = vmatmul.mubr.f32.gmra.mrb[0].mxu0 %v1118
    %v1120 = vpop.f32.mrb[0].mxu0
    %v1121 = vadd.f32 %v1037, %v1120
    %v1122 = vpop.f32.mrb[0].mxu0
    %1123 = vdwg.mxu0
    %v1124 = vlaneseq
    %v1125 = vshrl.u32 %v1124, 7
    %v1126 = vsub.s32 0, %v1125
    %v1127 = vrot.slane %v23, %v1126
    %v1129 = vsel %vm578, %v1109, 0
    %v1132 = vsel %vm578, %v1115, 0
    %v1135 = vsel %vm578, %v1121, 0
    %v1138 = vsel %vm588, %v22, 0
    %1140 = vmatprep.subr.mxu0 0.0
    %v1141 = vand.u32 %v1138, 4294901760
    %1142 = vmatpush1.msra.mxu0 %v1141
    %1143 = vmatprep.subr.mxu0 0.0
    %1144 = vmatpush1.msra.mxu0 0.0
    %1145 = vmatprep.subr.mxu0 0.0
    %1146 = vmatpush1.msra.mxu0 0.0
    %1147 = vmatprep.subr.mxu0 0.0
    %1148 = vmatpush1.msra.mxu0 0.0
    %1149 = vmatprep.subr.mxu0 0.0
    %1150 = vmatpush1.msra.mxu0 0.0
    %1151 = vmatprep.subr.mxu0 0.0
    %1152 = vmatpush1.msra.mxu0 0.0
    %1153 = vmatprep.subr.mxu0 0.0
    %1154 = vmatpush1.msra.mxu0 0.0
    %1155 = vmatprep.subr.mxu0 0.0
    %1156 = vmatpush1.msra.mxu0 0.0
    %1157 = vmatprep.subr.mxu0 0.0
    %1158 = vmatpush1.msra.mxu0 0.0
    %1159 = vmatprep.subr.mxu0 0.0
    %1160 = vmatpush1.msra.mxu0 0.0
    %1161 = vmatprep.subr.mxu0 0.0
    %1162 = vmatpush1.msra.mxu0 0.0
    %1163 = vmatprep.subr.mxu0 0.0
    %1164 = vmatpush1.msra.mxu0 0.0
    %1165 = vmatprep.subr.mxu0 0.0
    %1166 = vmatpush1.msra.mxu0 0.0
    %1167 = vmatprep.subr.mxu0 0.0
    %1168 = vmatpush1.msra.mxu0 0.0
    %1169 = vmatprep.subr.mxu0 0.0
    %1170 = vmatpush1.msra.mxu0 0.0
    %1171 = vmatprep.subr.mxu0 0.0
    %1172 = vmatpush1.msra.mxu0 0.0
    %1173 = vmatprep.subr.mxu0 0.0
    %1174 = vmatpush1.msra.mxu0 0.0
    %1175 = vmatprep.subr.mxu0 0.0
    %1176 = vmatpush1.msra.mxu0 0.0
    %1177 = vmatprep.subr.mxu0 0.0
    %1178 = vmatpush1.msra.mxu0 0.0
    %1179 = vmatprep.subr.mxu0 0.0
    %1180 = vmatpush1.msra.mxu0 0.0
    %1181 = vmatprep.subr.mxu0 0.0
    %1182 = vmatpush1.msra.mxu0 0.0
    %1183 = vmatprep.subr.mxu0 0.0
    %1184 = vmatpush1.msra.mxu0 0.0
    %1185 = vmatprep.subr.mxu0 0.0
    %1186 = vmatpush1.msra.mxu0 0.0
    %1187 = vmatprep.subr.mxu0 0.0
    %1188 = vmatpush1.msra.mxu0 0.0
    %1189 = vmatprep.subr.mxu0 0.0
    %1190 = vmatpush1.msra.mxu0 0.0
    %1191 = vmatprep.subr.mxu0 0.0
    %1192 = vmatpush1.msra.mxu0 0.0
    %1193 = vmatprep.subr.mxu0 0.0
    %1194 = vmatpush1.msra.mxu0 0.0
    %1195 = vmatprep.subr.mxu0 0.0
    %1196 = vmatpush1.msra.mxu0 0.0
    %1197 = vmatprep.subr.mxu0 0.0
    %1198 = vmatpush1.msra.mxu0 0.0
    %1199 = vmatprep.subr.mxu0 0.0
    %1200 = vmatpush1.msra.mxu0 0.0
    %1201 = vmatprep.subr.mxu0 0.0
    %1202 = vmatpush1.msra.mxu0 0.0
    %1203 = vmatprep.subr.mxu0 0.0
    %1204 = vmatpush1.msra.mxu0 0.0
    %1205 = vmatprep.mubr.f32.mxu0 0.0
    %v1206 = vand.u32 %v1129, 4294901760
    %v1207 = vsub.f32 %v1129, %v1206
    %v1208 = vand.u32 %v1207, 4294901760
    %v1209 = vsub.f32 %v1207, %v1208
    %v1210 = vand.u32 %v1209, 4294901760
    %1211 = vmatmul.mubr.f32.gmra.mrb[0].mxu0 %v1210
    %v1212 = vpop.f32.mrb[0].mxu0
    %v1213 = vadd.f32 %v1127, %v1212
    %v1214 = vpop.f32.mrb[0].mxu0
    %1215 = vmatprep.mubr.f32.mxu0 0.0
    %v1216 = vand.u32 %v1132, 4294901760
    %v1217 = vsub.f32 %v1132, %v1216
    %v1218 = vand.u32 %v1217, 4294901760
    %v1219 = vsub.f32 %v1217, %v1218
    %v1220 = vand.u32 %v1219, 4294901760
    %1221 = vmatmul.mubr.f32.gmra.mrb[0].mxu0 %v1220
    %v1222 = vpop.f32.mrb[0].mxu0
    %v1223 = vadd.f32 %v1127, %v1222
    %v1224 = vpop.f32.mrb[0].mxu0
    %1225 = vmatprep.mubr.f32.mxu0 0.0
    %v1226 = vand.u32 %v1135, 4294901760
    %v1227 = vsub.f32 %v1135, %v1226
    %v1228 = vand.u32 %v1227, 4294901760
    %v1229 = vsub.f32 %v1227, %v1228
    %v1230 = vand.u32 %v1229, 4294901760
    %1231 = vmatmul.mubr.f32.gmra.mrb[0].mxu0 %v1230
    %v1232 = vpop.f32.mrb[0].mxu0
    %v1233 = vadd.f32 %v1127, %v1232
    %v1234 = vpop.f32.mrb[0].mxu0
    %1235 = vdwg.mxu0
    %1236 = vmatprep.subr.mxu0 0.0
    %v1237 = vand.u32 %v1138, 4294901760
    %v1238 = vsub.f32 %v1138, %v1237
    %v1239 = vand.u32 %v1238, 4294901760
    %v1240 = vsub.f32 %v1238, %v1239
    %v1241 = vand.u32 %v1240, 4294901760
    %1242 = vmatpush1.msra.mxu0 %v1241
    %1243 = vmatprep.subr.mxu0 0.0
    %1244 = vmatpush1.msra.mxu0 0.0
    %1245 = vmatprep.subr.mxu0 0.0
    %1246 = vmatpush1.msra.mxu0 0.0
    %1247 = vmatprep.subr.mxu0 0.0
    %1248 = vmatpush1.msra.mxu0 0.0
    %1249 = vmatprep.subr.mxu0 0.0
    %1250 = vmatpush1.msra.mxu0 0.0
    %1251 = vmatprep.subr.mxu0 0.0
    %1252 = vmatpush1.msra.mxu0 0.0
    %1253 = vmatprep.subr.mxu0 0.0
    %1254 = vmatpush1.msra.mxu0 0.0
    %1255 = vmatprep.subr.mxu0 0.0
    %1256 = vmatpush1.msra.mxu0 0.0
    %1257 = vmatprep.subr.mxu0 0.0
    %1258 = vmatpush1.msra.mxu0 0.0
    %1259 = vmatprep.subr.mxu0 0.0
    %1260 = vmatpush1.msra.mxu0 0.0
    %1261 = vmatprep.subr.mxu0 0.0
    %1262 = vmatpush1.msra.mxu0 0.0
    %1263 = vmatprep.subr.mxu0 0.0
    %1264 = vmatpush1.msra.mxu0 0.0
    %1265 = vmatprep.subr.mxu0 0.0
    %1266 = vmatpush1.msra.mxu0 0.0
    %1267 = vmatprep.subr.mxu0 0.0
    %1268 = vmatpush1.msra.mxu0 0.0
    %1269 = vmatprep.subr.mxu0 0.0
    %1270 = vmatpush1.msra.mxu0 0.0
    %1271 = vmatprep.subr.mxu0 0.0
    %1272 = vmatpush1.msra.mxu0 0.0
    %1273 = vmatprep.subr.mxu0 0.0
    %1274 = vmatpush1.msra.mxu0 0.0
    %1275 = vmatprep.subr.mxu0 0.0
    %1276 = vmatpush1.msra.mxu0 0.0
    %1277 = vmatprep.subr.mxu0 0.0
    %1278 = vmatpush1.msra.mxu0 0.0
    %1279 = vmatprep.subr.mxu0 0.0
    %1280 = vmatpush1.msra.mxu0 0.0
    %1281 = vmatprep.subr.mxu0 0.0
    %1282 = vmatpush1.msra.mxu0 0.0
    %1283 = vmatprep.subr.mxu0 0.0
    %1284 = vmatpush1.msra.mxu0 0.0
    %1285 = vmatprep.subr.mxu0 0.0
    %1286 = vmatpush1.msra.mxu0 0.0
    %1287 = vmatprep.subr.mxu0 0.0
    %1288 = vmatpush1.msra.mxu0 0.0
    %1289 = vmatprep.subr.mxu0 0.0
    %1290 = vmatpush1.msra.mxu0 0.0
    %1291 = vmatprep.subr.mxu0 0.0
    %1292 = vmatpush1.msra.mxu0 0.0
    %1293 = vmatprep.subr.mxu0 0.0
    %1294 = vmatpush1.msra.mxu0 0.0
    %1295 = vmatprep.subr.mxu0 0.0
    %1296 = vmatpush1.msra.mxu0 0.0
    %1297 = vmatprep.subr.mxu0 0.0
    %1298 = vmatpush1.msra.mxu0 0.0
    %1299 = vmatprep.subr.mxu0 0.0
    %1300 = vmatpush1.msra.mxu0 0.0
    %1301 = vmatprep.subr.mxu0 0.0
    %1302 = vmatpush1.msra.mxu0 0.0
    %1303 = vmatprep.subr.mxu0 0.0
    %1304 = vmatpush1.msra.mxu0 0.0
    %1305 = vmatprep.mubr.f32.mxu0 0.0
    %v1306 = vand.u32 %v1129, 4294901760
    %1307 = vmatmul.mubr.f32.gmra.mrb[0].mxu0 %v1306
    %v1308 = vpop.f32.mrb[0].mxu0
    %v1309 = vadd.f32 %v1213, %v1308
    %v1310 = vpop.f32.mrb[0].mxu0
    %1311 = vmatprep.mubr.f32.mxu0 0.0
    %v1312 = vand.u32 %v1132, 4294901760
    %1313 = vmatmul.mubr.f32.gmra.mrb[0].mxu0 %v1312
    %v1314 = vpop.f32.mrb[0].mxu0
    %v1315 = vadd.f32 %v1223, %v1314
    %v1316 = vpop.f32.mrb[0].mxu0
    %1317 = vmatprep.mubr.f32.mxu0 0.0
    %v1318 = vand.u32 %v1135, 4294901760
    %1319 = vmatmul.mubr.f32.gmra.mrb[0].mxu0 %v1318
    %v1320 = vpop.f32.mrb[0].mxu0
    %v1321 = vadd.f32 %v1233, %v1320
    %v1322 = vpop.f32.mrb[0].mxu0
    %1323 = vdwg.mxu0
    %1324 = vmatprep.subr.mxu0 0.0
    %v1325 = vand.u32 %v1138, 4294901760
    %v1326 = vsub.f32 %v1138, %v1325
    %1327 = vmatpush1.msra.mxu0 %v1326
    %1328 = vmatprep.subr.mxu0 0.0
    %1329 = vmatpush1.msra.mxu0 0.0
    %1330 = vmatprep.subr.mxu0 0.0
    %1331 = vmatpush1.msra.mxu0 0.0
    %1332 = vmatprep.subr.mxu0 0.0
    %1333 = vmatpush1.msra.mxu0 0.0
    %1334 = vmatprep.subr.mxu0 0.0
    %1335 = vmatpush1.msra.mxu0 0.0
    %1336 = vmatprep.subr.mxu0 0.0
    %1337 = vmatpush1.msra.mxu0 0.0
    %1338 = vmatprep.subr.mxu0 0.0
    %1339 = vmatpush1.msra.mxu0 0.0
    %1340 = vmatprep.subr.mxu0 0.0
    %1341 = vmatpush1.msra.mxu0 0.0
    %1342 = vmatprep.subr.mxu0 0.0
    %1343 = vmatpush1.msra.mxu0 0.0
    %1344 = vmatprep.subr.mxu0 0.0
    %1345 = vmatpush1.msra.mxu0 0.0
    %1346 = vmatprep.subr.mxu0 0.0
    %1347 = vmatpush1.msra.mxu0 0.0
    %1348 = vmatprep.subr.mxu0 0.0
    %1349 = vmatpush1.msra.mxu0 0.0
    %1350 = vmatprep.subr.mxu0 0.0
    %1351 = vmatpush1.msra.mxu0 0.0
    %1352 = vmatprep.subr.mxu0 0.0
    %1353 = vmatpush1.msra.mxu0 0.0
    %1354 = vmatprep.subr.mxu0 0.0
    %1355 = vmatpush1.msra.mxu0 0.0
    %1356 = vmatprep.subr.mxu0 0.0
    %1357 = vmatpush1.msra.mxu0 0.0
    %1358 = vmatprep.subr.mxu0 0.0
    %1359 = vmatpush1.msra.mxu0 0.0
    %1360 = vmatprep.subr.mxu0 0.0
    %1361 = vmatpush1.msra.mxu0 0.0
    %1362 = vmatprep.subr.mxu0 0.0
    %1363 = vmatpush1.msra.mxu0 0.0
    %1364 = vmatprep.subr.mxu0 0.0
    %1365 = vmatpush1.msra.mxu0 0.0
    %1366 = vmatprep.subr.mxu0 0.0
    %1367 = vmatpush1.msra.mxu0 0.0
    %1368 = vmatprep.subr.mxu0 0.0
    %1369 = vmatpush1.msra.mxu0 0.0
    %1370 = vmatprep.subr.mxu0 0.0
    %1371 = vmatpush1.msra.mxu0 0.0
    %1372 = vmatprep.subr.mxu0 0.0
    %1373 = vmatpush1.msra.mxu0 0.0
    %1374 = vmatprep.subr.mxu0 0.0
    %1375 = vmatpush1.msra.mxu0 0.0
    %1376 = vmatprep.subr.mxu0 0.0
    %1377 = vmatpush1.msra.mxu0 0.0
    %1378 = vmatprep.subr.mxu0 0.0
    %1379 = vmatpush1.msra.mxu0 0.0
    %1380 = vmatprep.subr.mxu0 0.0
    %1381 = vmatpush1.msra.mxu0 0.0
    %1382 = vmatprep.subr.mxu0 0.0
    %1383 = vmatpush1.msra.mxu0 0.0
    %1384 = vmatprep.subr.mxu0 0.0
    %1385 = vmatpush1.msra.mxu0 0.0
    %1386 = vmatprep.subr.mxu0 0.0
    %1387 = vmatpush1.msra.mxu0 0.0
    %1388 = vmatprep.subr.mxu0 0.0
    %1389 = vmatpush1.msra.mxu0 0.0
    %1390 = vmatprep.mubr.f32.mxu0 0.0
    %v1391 = vand.u32 %v1129, 4294901760
    %v1392 = vsub.f32 %v1129, %v1391
    %1393 = vmatmul.mubr.f32.gmra.mrb[0].mxu0 %v1392
    %v1394 = vpop.f32.mrb[0].mxu0
    %v1395 = vadd.f32 %v1309, %v1394
    %v1396 = vpop.f32.mrb[0].mxu0
    %1397 = vmatprep.mubr.f32.mxu0 0.0
    %v1398 = vand.u32 %v1132, 4294901760
    %v1399 = vsub.f32 %v1132, %v1398
    %1400 = vmatmul.mubr.f32.gmra.mrb[0].mxu0 %v1399
    %v1401 = vpop.f32.mrb[0].mxu0
    %v1402 = vadd.f32 %v1315, %v1401
    %v1403 = vpop.f32.mrb[0].mxu0
    %1404 = vmatprep.mubr.f32.mxu0 0.0
    %v1405 = vand.u32 %v1135, 4294901760
    %v1406 = vsub.f32 %v1135, %v1405
    %1407 = vmatmul.mubr.f32.gmra.mrb[0].mxu0 %v1406
    %v1408 = vpop.f32.mrb[0].mxu0
    %v1409 = vadd.f32 %v1321, %v1408
    %v1410 = vpop.f32.mrb[0].mxu0
    %1411 = vdwg.mxu0
    %1412 = vmatprep.subr.mxu0 0.0
    %v1413 = vand.u32 %v1138, 4294901760
    %1414 = vmatpush1.msra.mxu0 %v1413
    %1415 = vmatprep.subr.mxu0 0.0
    %1416 = vmatpush1.msra.mxu0 0.0
    %1417 = vmatprep.subr.mxu0 0.0
    %1418 = vmatpush1.msra.mxu0 0.0
    %1419 = vmatprep.subr.mxu0 0.0
    %1420 = vmatpush1.msra.mxu0 0.0
    %1421 = vmatprep.subr.mxu0 0.0
    %1422 = vmatpush1.msra.mxu0 0.0
    %1423 = vmatprep.subr.mxu0 0.0
    %1424 = vmatpush1.msra.mxu0 0.0
    %1425 = vmatprep.subr.mxu0 0.0
    %1426 = vmatpush1.msra.mxu0 0.0
    %1427 = vmatprep.subr.mxu0 0.0
    %1428 = vmatpush1.msra.mxu0 0.0
    %1429 = vmatprep.subr.mxu0 0.0
    %1430 = vmatpush1.msra.mxu0 0.0
    %1431 = vmatprep.subr.mxu0 0.0
    %1432 = vmatpush1.msra.mxu0 0.0
    %1433 = vmatprep.subr.mxu0 0.0
    %1434 = vmatpush1.msra.mxu0 0.0
    %1435 = vmatprep.subr.mxu0 0.0
    %1436 = vmatpush1.msra.mxu0 0.0
    %1437 = vmatprep.subr.mxu0 0.0
    %1438 = vmatpush1.msra.mxu0 0.0
    %1439 = vmatprep.subr.mxu0 0.0
    %1440 = vmatpush1.msra.mxu0 0.0
    %1441 = vmatprep.subr.mxu0 0.0
    %1442 = vmatpush1.msra.mxu0 0.0
    %1443 = vmatprep.subr.mxu0 0.0
    %1444 = vmatpush1.msra.mxu0 0.0
    %1445 = vmatprep.subr.mxu0 0.0
    %1446 = vmatpush1.msra.mxu0 0.0
    %1447 = vmatprep.subr.mxu0 0.0
    %1448 = vmatpush1.msra.mxu0 0.0
    %1449 = vmatprep.subr.mxu0 0.0
    %1450 = vmatpush1.msra.mxu0 0.0
    %1451 = vmatprep.subr.mxu0 0.0
    %1452 = vmatpush1.msra.mxu0 0.0
    %1453 = vmatprep.subr.mxu0 0.0
    %1454 = vmatpush1.msra.mxu0 0.0
    %1455 = vmatprep.subr.mxu0 0.0
    %1456 = vmatpush1.msra.mxu0 0.0
    %1457 = vmatprep.subr.mxu0 0.0
    %1458 = vmatpush1.msra.mxu0 0.0
    %1459 = vmatprep.subr.mxu0 0.0
    %1460 = vmatpush1.msra.mxu0 0.0
    %1461 = vmatprep.subr.mxu0 0.0
    %1462 = vmatpush1.msra.mxu0 0.0
    %1463 = vmatprep.subr.mxu0 0.0
    %1464 = vmatpush1.msra.mxu0 0.0
    %1465 = vmatprep.subr.mxu0 0.0
    %1466 = vmatpush1.msra.mxu0 0.0
    %1467 = vmatprep.subr.mxu0 0.0
    %1468 = vmatpush1.msra.mxu0 0.0
    %1469 = vmatprep.subr.mxu0 0.0
    %1470 = vmatpush1.msra.mxu0 0.0
    %1471 = vmatprep.subr.mxu0 0.0
    %1472 = vmatpush1.msra.mxu0 0.0
    %1473 = vmatprep.subr.mxu0 0.0
    %1474 = vmatpush1.msra.mxu0 0.0
    %1475 = vmatprep.subr.mxu0 0.0
    %1476 = vmatpush1.msra.mxu0 0.0
    %1477 = vmatprep.mubr.f32.mxu0 0.0
    %v1478 = vand.u32 %v1129, 4294901760
    %v1479 = vsub.f32 %v1129, %v1478
    %v1480 = vand.u32 %v1479, 4294901760
    %1481 = vmatmul.mubr.f32.gmra.mrb[0].mxu0 %v1480
    %v1482 = vpop.f32.mrb[0].mxu0
    %v1483 = vadd.f32 %v1395, %v1482
    %v1484 = vpop.f32.mrb[0].mxu0
    %1485 = vmatprep.mubr.f32.mxu0 0.0
    %v1486 = vand.u32 %v1132, 4294901760
    %v1487 = vsub.f32 %v1132, %v1486
    %v1488 = vand.u32 %v1487, 4294901760
    %1489 = vmatmul.mubr.f32.gmra.mrb[0].mxu0 %v1488
    %v1490 = vpop.f32.mrb[0].mxu0
    %v1491 = vadd.f32 %v1402, %v1490
    %v1492 = vpop.f32.mrb[0].mxu0
    %1493 = vmatprep.mubr.f32.mxu0 0.0
    %v1494 = vand.u32 %v1135, 4294901760
    %v1495 = vsub.f32 %v1135, %v1494
    %v1496 = vand.u32 %v1495, 4294901760
    %1497 = vmatmul.mubr.f32.gmra.mrb[0].mxu0 %v1496
    %v1498 = vpop.f32.mrb[0].mxu0
    %v1499 = vadd.f32 %v1409, %v1498
    %v1500 = vpop.f32.mrb[0].mxu0
    %1501 = vdwg.mxu0
    %1502 = vmatprep.subr.mxu0 0.0
    %v1503 = vand.u32 %v1138, 4294901760
    %v1504 = vsub.f32 %v1138, %v1503
    %v1505 = vand.u32 %v1504, 4294901760
    %1506 = vmatpush1.msra.mxu0 %v1505
    %1507 = vmatprep.subr.mxu0 0.0
    %1508 = vmatpush1.msra.mxu0 0.0
    %1509 = vmatprep.subr.mxu0 0.0
    %1510 = vmatpush1.msra.mxu0 0.0
    %1511 = vmatprep.subr.mxu0 0.0
    %1512 = vmatpush1.msra.mxu0 0.0
    %1513 = vmatprep.subr.mxu0 0.0
    %1514 = vmatpush1.msra.mxu0 0.0
    %1515 = vmatprep.subr.mxu0 0.0
    %1516 = vmatpush1.msra.mxu0 0.0
    %1517 = vmatprep.subr.mxu0 0.0
    %1518 = vmatpush1.msra.mxu0 0.0
    %1519 = vmatprep.subr.mxu0 0.0
    %1520 = vmatpush1.msra.mxu0 0.0
    %1521 = vmatprep.subr.mxu0 0.0
    %1522 = vmatpush1.msra.mxu0 0.0
    %1523 = vmatprep.subr.mxu0 0.0
    %1524 = vmatpush1.msra.mxu0 0.0
    %1525 = vmatprep.subr.mxu0 0.0
    %1526 = vmatpush1.msra.mxu0 0.0
    %1527 = vmatprep.subr.mxu0 0.0
    %1528 = vmatpush1.msra.mxu0 0.0
    %1529 = vmatprep.subr.mxu0 0.0
    %1530 = vmatpush1.msra.mxu0 0.0
    %1531 = vmatprep.subr.mxu0 0.0
    %1532 = vmatpush1.msra.mxu0 0.0
    %1533 = vmatprep.subr.mxu0 0.0
    %1534 = vmatpush1.msra.mxu0 0.0
    %1535 = vmatprep.subr.mxu0 0.0
    %1536 = vmatpush1.msra.mxu0 0.0
    %1537 = vmatprep.subr.mxu0 0.0
    %1538 = vmatpush1.msra.mxu0 0.0
    %1539 = vmatprep.subr.mxu0 0.0
    %1540 = vmatpush1.msra.mxu0 0.0
    %1541 = vmatprep.subr.mxu0 0.0
    %1542 = vmatpush1.msra.mxu0 0.0
    %1543 = vmatprep.subr.mxu0 0.0
    %1544 = vmatpush1.msra.mxu0 0.0
    %1545 = vmatprep.subr.mxu0 0.0
    %1546 = vmatpush1.msra.mxu0 0.0
    %1547 = vmatprep.subr.mxu0 0.0
    %1548 = vmatpush1.msra.mxu0 0.0
    %1549 = vmatprep.subr.mxu0 0.0
    %1550 = vmatpush1.msra.mxu0 0.0
    %1551 = vmatprep.subr.mxu0 0.0
    %1552 = vmatpush1.msra.mxu0 0.0
    %1553 = vmatprep.subr.mxu0 0.0
    %1554 = vmatpush1.msra.mxu0 0.0
    %1555 = vmatprep.subr.mxu0 0.0
    %1556 = vmatpush1.msra.mxu0 0.0
    %1557 = vmatprep.subr.mxu0 0.0
    %1558 = vmatpush1.msra.mxu0 0.0
    %1559 = vmatprep.subr.mxu0 0.0
    %1560 = vmatpush1.msra.mxu0 0.0
    %1561 = vmatprep.subr.mxu0 0.0
    %1562 = vmatpush1.msra.mxu0 0.0
    %1563 = vmatprep.subr.mxu0 0.0
    %1564 = vmatpush1.msra.mxu0 0.0
    %1565 = vmatprep.subr.mxu0 0.0
    %1566 = vmatpush1.msra.mxu0 0.0
    %1567 = vmatprep.subr.mxu0 0.0
    %1568 = vmatpush1.msra.mxu0 0.0
    %1569 = vmatprep.mubr.f32.mxu0 0.0
    %v1570 = vand.u32 %v1129, 4294901760
    %1571 = vmatmul.mubr.f32.gmra.mrb[0].mxu0 %v1570
    %v1572 = vpop.f32.mrb[0].mxu0
    %v1573 = vadd.f32 %v1483, %v1572
    %v1574 = vpop.f32.mrb[0].mxu0
    %1575 = vmatprep.mubr.f32.mxu0 0.0
    %v1576 = vand.u32 %v1132, 4294901760
    %1577 = vmatmul.mubr.f32.gmra.mrb[0].mxu0 %v1576
    %v1578 = vpop.f32.mrb[0].mxu0
    %v1579 = vadd.f32 %v1491, %v1578
    %v1580 = vpop.f32.mrb[0].mxu0
    %1581 = vmatprep.mubr.f32.mxu0 0.0
    %v1582 = vand.u32 %v1135, 4294901760
    %1583 = vmatmul.mubr.f32.gmra.mrb[0].mxu0 %v1582
    %v1584 = vpop.f32.mrb[0].mxu0
    %v1585 = vadd.f32 %v1499, %v1584
    %v1586 = vpop.f32.mrb[0].mxu0
    %1587 = vdwg.mxu0
    %1588 = vmatprep.subr.mxu0 0.0
    %v1589 = vand.u32 %v1138, 4294901760
    %1590 = vmatpush1.msra.mxu0 %v1589
    %1591 = vmatprep.subr.mxu0 0.0
    %1592 = vmatpush1.msra.mxu0 0.0
    %1593 = vmatprep.subr.mxu0 0.0
    %1594 = vmatpush1.msra.mxu0 0.0
    %1595 = vmatprep.subr.mxu0 0.0
    %1596 = vmatpush1.msra.mxu0 0.0
    %1597 = vmatprep.subr.mxu0 0.0
    %1598 = vmatpush1.msra.mxu0 0.0
    %1599 = vmatprep.subr.mxu0 0.0
    %1600 = vmatpush1.msra.mxu0 0.0
    %1601 = vmatprep.subr.mxu0 0.0
    %1602 = vmatpush1.msra.mxu0 0.0
    %1603 = vmatprep.subr.mxu0 0.0
    %1604 = vmatpush1.msra.mxu0 0.0
    %1605 = vmatprep.subr.mxu0 0.0
    %1606 = vmatpush1.msra.mxu0 0.0
    %1607 = vmatprep.subr.mxu0 0.0
    %1608 = vmatpush1.msra.mxu0 0.0
    %1609 = vmatprep.subr.mxu0 0.0
    %1610 = vmatpush1.msra.mxu0 0.0
    %1611 = vmatprep.subr.mxu0 0.0
    %1612 = vmatpush1.msra.mxu0 0.0
    %1613 = vmatprep.subr.mxu0 0.0
    %1614 = vmatpush1.msra.mxu0 0.0
    %1615 = vmatprep.subr.mxu0 0.0
    %1616 = vmatpush1.msra.mxu0 0.0
    %1617 = vmatprep.subr.mxu0 0.0
    %1618 = vmatpush1.msra.mxu0 0.0
    %1619 = vmatprep.subr.mxu0 0.0
    %1620 = vmatpush1.msra.mxu0 0.0
    %1621 = vmatprep.subr.mxu0 0.0
    %1622 = vmatpush1.msra.mxu0 0.0
    %1623 = vmatprep.subr.mxu0 0.0
    %1624 = vmatpush1.msra.mxu0 0.0
    %1625 = vmatprep.subr.mxu0 0.0
    %1626 = vmatpush1.msra.mxu0 0.0
    %1627 = vmatprep.subr.mxu0 0.0
    %1628 = vmatpush1.msra.mxu0 0.0
    %1629 = vmatprep.subr.mxu0 0.0
    %1630 = vmatpush1.msra.mxu0 0.0
    %1631 = vmatprep.subr.mxu0 0.0
    %1632 = vmatpush1.msra.mxu0 0.0
    %1633 = vmatprep.subr.mxu0 0.0
    %1634 = vmatpush1.msra.mxu0 0.0
    %1635 = vmatprep.subr.mxu0 0.0
    %1636 = vmatpush1.msra.mxu0 0.0
    %1637 = vmatprep.subr.mxu0 0.0
    %1638 = vmatpush1.msra.mxu0 0.0
    %1639 = vmatprep.subr.mxu0 0.0
    %1640 = vmatpush1.msra.mxu0 0.0
    %1641 = vmatprep.subr.mxu0 0.0
    %1642 = vmatpush1.msra.mxu0 0.0
    %1643 = vmatprep.subr.mxu0 0.0
    %1644 = vmatpush1.msra.mxu0 0.0
    %1645 = vmatprep.subr.mxu0 0.0
    %1646 = vmatpush1.msra.mxu0 0.0
    %1647 = vmatprep.subr.mxu0 0.0
    %1648 = vmatpush1.msra.mxu0 0.0
    %1649 = vmatprep.subr.mxu0 0.0
    %1650 = vmatpush1.msra.mxu0 0.0
    %1651 = vmatprep.subr.mxu0 0.0
    %1652 = vmatpush1.msra.mxu0 0.0
    %1653 = vmatprep.mubr.f32.mxu0 0.0
    %v1654 = vand.u32 %v1129, 4294901760
    %1655 = vmatmul.mubr.f32.gmra.mrb[0].mxu0 %v1654
    %v1656 = vpop.f32.mrb[0].mxu0
    %v1657 = vadd.f32 %v1573, %v1656
    %v1658 = vpop.f32.mrb[0].mxu0
    %1659 = vmatprep.mubr.f32.mxu0 0.0
    %v1660 = vand.u32 %v1132, 4294901760
    %1661 = vmatmul.mubr.f32.gmra.mrb[0].mxu0 %v1660
    %v1662 = vpop.f32.mrb[0].mxu0
    %v1663 = vadd.f32 %v1579, %v1662
    %v1664 = vpop.f32.mrb[0].mxu0
    %1665 = vmatprep.mubr.f32.mxu0 0.0
    %v1666 = vand.u32 %v1135, 4294901760
    %1667 = vmatmul.mubr.f32.gmra.mrb[0].mxu0 %v1666
    %v1668 = vpop.f32.mrb[0].mxu0
    %v1669 = vadd.f32 %v1585, %v1668
    %v1670 = vpop.f32.mrb[0].mxu0
    %1671 = vdwg.mxu0
    %v1672 = vld [vmem:[%s1 + $0xf] sm:$0x3]
    %v1673 = vld [vmem:[%s1 + $0x11] sm:$0x1]
    %v1674 = vlaneseq
    %v1675 = vshrl.u32 %v1674, 7
    %v1676 = vsub.s32 0, %v1675
    %v1677 = vrot.slane %v1673, %v1676
    %v1679 = vsel %vm28, %v1657, 0
    %v1682 = vsel %vm28, %v1663, 0
    %v1685 = vsel %vm28, %v1669, 0
    %v1688 = vsel %vm38, %v1672, 0
    %1690 = vmatprep.subr.mxu0 0.0
    %v1691 = vand.u32 %v1688, 4294901760
    %1692 = vmatpush1.msra.mxu0 %v1691
    %1693 = vmatprep.subr.mxu0 0.0
    %1694 = vmatpush1.msra.mxu0 0.0
    %1695 = vmatprep.subr.mxu0 0.0
    %1696 = vmatpush1.msra.mxu0 0.0
    %1697 = vmatprep.subr.mxu0 0.0
    %1698 = vmatpush1.msra.mxu0 0.0
    %1699 = vmatprep.subr.mxu0 0.0
    %1700 = vmatpush1.msra.mxu0 0.0
    %1701 = vmatprep.subr.mxu0 0.0
    %1702 = vmatpush1.msra.mxu0 0.0
    %1703 = vmatprep.subr.mxu0 0.0
    %1704 = vmatpush1.msra.mxu0 0.0
    %1705 = vmatprep.subr.mxu0 0.0
    %1706 = vmatpush1.msra.mxu0 0.0
    %1707 = vmatprep.subr.mxu0 0.0
    %1708 = vmatpush1.msra.mxu0 0.0
    %1709 = vmatprep.subr.mxu0 0.0
    %1710 = vmatpush1.msra.mxu0 0.0
    %1711 = vmatprep.subr.mxu0 0.0
    %1712 = vmatpush1.msra.mxu0 0.0
    %1713 = vmatprep.subr.mxu0 0.0
    %1714 = vmatpush1.msra.mxu0 0.0
    %1715 = vmatprep.subr.mxu0 0.0
    %1716 = vmatpush1.msra.mxu0 0.0
    %1717 = vmatprep.subr.mxu0 0.0
    %1718 = vmatpush1.msra.mxu0 0.0
    %1719 = vmatprep.subr.mxu0 0.0
    %1720 = vmatpush1.msra.mxu0 0.0
    %1721 = vmatprep.subr.mxu0 0.0
    %1722 = vmatpush1.msra.mxu0 0.0
    %1723 = vmatprep.subr.mxu0 0.0
    %1724 = vmatpush1.msra.mxu0 0.0
    %1725 = vmatprep.subr.mxu0 0.0
    %1726 = vmatpush1.msra.mxu0 0.0
    %1727 = vmatprep.subr.mxu0 0.0
    %1728 = vmatpush1.msra.mxu0 0.0
    %1729 = vmatprep.subr.mxu0 0.0
    %1730 = vmatpush1.msra.mxu0 0.0
    %1731 = vmatprep.subr.mxu0 0.0
    %1732 = vmatpush1.msra.mxu0 0.0
    %1733 = vmatprep.subr.mxu0 0.0
    %1734 = vmatpush1.msra.mxu0 0.0
    %1735 = vmatprep.subr.mxu0 0.0
    %1736 = vmatpush1.msra.mxu0 0.0
    %1737 = vmatprep.subr.mxu0 0.0
    %1738 = vmatpush1.msra.mxu0 0.0
    %1739 = vmatprep.subr.mxu0 0.0
    %1740 = vmatpush1.msra.mxu0 0.0
    %1741 = vmatprep.subr.mxu0 0.0
    %1742 = vmatpush1.msra.mxu0 0.0
    %1743 = vmatprep.subr.mxu0 0.0
    %1744 = vmatpush1.msra.mxu0 0.0
    %1745 = vmatprep.subr.mxu0 0.0
    %1746 = vmatpush1.msra.mxu0 0.0
    %1747 = vmatprep.subr.mxu0 0.0
    %1748 = vmatpush1.msra.mxu0 0.0
    %1749 = vmatprep.subr.mxu0 0.0
    %1750 = vmatpush1.msra.mxu0 0.0
    %1751 = vmatprep.subr.mxu0 0.0
    %1752 = vmatpush1.msra.mxu0 0.0
    %1753 = vmatprep.subr.mxu0 0.0
    %1754 = vmatpush1.msra.mxu0 0.0
    %1755 = vmatprep.mubr.f32.mxu0 0.0
    %v1756 = vand.u32 %v1679, 4294901760
    %v1757 = vsub.f32 %v1679, %v1756
    %v1758 = vand.u32 %v1757, 4294901760
    %v1759 = vsub.f32 %v1757, %v1758
    %v1760 = vand.u32 %v1759, 4294901760
    %1761 = vmatmul.mubr.f32.gmra.mrb[0].mxu0 %v1760
    %v1762 = vpop.f32.mrb[0].mxu0
    %v1763 = vadd.f32 %v1677, %v1762
    %v1764 = vpop.f32.mrb[0].mxu0
    %1765 = vmatprep.mubr.f32.mxu0 0.0
    %v1766 = vand.u32 %v1682, 4294901760
    %v1767 = vsub.f32 %v1682, %v1766
    %v1768 = vand.u32 %v1767, 4294901760
    %v1769 = vsub.f32 %v1767, %v1768
    %v1770 = vand.u32 %v1769, 4294901760
    %1771 = vmatmul.mubr.f32.gmra.mrb[0].mxu0 %v1770
    %v1772 = vpop.f32.mrb[0].mxu0
    %v1773 = vadd.f32 %v1677, %v1772
    %v1774 = vpop.f32.mrb[0].mxu0
    %1775 = vmatprep.mubr.f32.mxu0 0.0
    %v1776 = vand.u32 %v1685, 4294901760
    %v1777 = vsub.f32 %v1685, %v1776
    %v1778 = vand.u32 %v1777, 4294901760
    %v1779 = vsub.f32 %v1777, %v1778
    %v1780 = vand.u32 %v1779, 4294901760
    %1781 = vmatmul.mubr.f32.gmra.mrb[0].mxu0 %v1780
    %v1782 = vpop.f32.mrb[0].mxu0
    %v1783 = vadd.f32 %v1677, %v1782
    %v1784 = vpop.f32.mrb[0].mxu0
    %1785 = vdwg.mxu0
    %1786 = vmatprep.subr.mxu0 0.0
    %v1787 = vand.u32 %v1688, 4294901760
    %v1788 = vsub.f32 %v1688, %v1787
    %v1789 = vand.u32 %v1788, 4294901760
    %v1790 = vsub.f32 %v1788, %v1789
    %v1791 = vand.u32 %v1790, 4294901760
    %1792 = vmatpush1.msra.mxu0 %v1791
    %1793 = vmatprep.subr.mxu0 0.0
    %1794 = vmatpush1.msra.mxu0 0.0
    %1795 = vmatprep.subr.mxu0 0.0
    %1796 = vmatpush1.msra.mxu0 0.0
    %1797 = vmatprep.subr.mxu0 0.0
    %1798 = vmatpush1.msra.mxu0 0.0
    %1799 = vmatprep.subr.mxu0 0.0
    %1800 = vmatpush1.msra.mxu0 0.0
    %1801 = vmatprep.subr.mxu0 0.0
    %1802 = vmatpush1.msra.mxu0 0.0
    %1803 = vmatprep.subr.mxu0 0.0
    %1804 = vmatpush1.msra.mxu0 0.0
    %1805 = vmatprep.subr.mxu0 0.0
    %1806 = vmatpush1.msra.mxu0 0.0
    %1807 = vmatprep.subr.mxu0 0.0
    %1808 = vmatpush1.msra.mxu0 0.0
    %1809 = vmatprep.subr.mxu0 0.0
    %1810 = vmatpush1.msra.mxu0 0.0
    %1811 = vmatprep.subr.mxu0 0.0
    %1812 = vmatpush1.msra.mxu0 0.0
    %1813 = vmatprep.subr.mxu0 0.0
    %1814 = vmatpush1.msra.mxu0 0.0
    %1815 = vmatprep.subr.mxu0 0.0
    %1816 = vmatpush1.msra.mxu0 0.0
    %1817 = vmatprep.subr.mxu0 0.0
    %1818 = vmatpush1.msra.mxu0 0.0
    %1819 = vmatprep.subr.mxu0 0.0
    %1820 = vmatpush1.msra.mxu0 0.0
    %1821 = vmatprep.subr.mxu0 0.0
    %1822 = vmatpush1.msra.mxu0 0.0
    %1823 = vmatprep.subr.mxu0 0.0
    %1824 = vmatpush1.msra.mxu0 0.0
    %1825 = vmatprep.subr.mxu0 0.0
    %1826 = vmatpush1.msra.mxu0 0.0
    %1827 = vmatprep.subr.mxu0 0.0
    %1828 = vmatpush1.msra.mxu0 0.0
    %1829 = vmatprep.subr.mxu0 0.0
    %1830 = vmatpush1.msra.mxu0 0.0
    %1831 = vmatprep.subr.mxu0 0.0
    %1832 = vmatpush1.msra.mxu0 0.0
    %1833 = vmatprep.subr.mxu0 0.0
    %1834 = vmatpush1.msra.mxu0 0.0
    %1835 = vmatprep.subr.mxu0 0.0
    %1836 = vmatpush1.msra.mxu0 0.0
    %1837 = vmatprep.subr.mxu0 0.0
    %1838 = vmatpush1.msra.mxu0 0.0
    %1839 = vmatprep.subr.mxu0 0.0
    %1840 = vmatpush1.msra.mxu0 0.0
    %1841 = vmatprep.subr.mxu0 0.0
    %1842 = vmatpush1.msra.mxu0 0.0
    %1843 = vmatprep.subr.mxu0 0.0
    %1844 = vmatpush1.msra.mxu0 0.0
    %1845 = vmatprep.subr.mxu0 0.0
    %1846 = vmatpush1.msra.mxu0 0.0
    %1847 = vmatprep.subr.mxu0 0.0
    %1848 = vmatpush1.msra.mxu0 0.0
    %1849 = vmatprep.subr.mxu0 0.0
    %1850 = vmatpush1.msra.mxu0 0.0
    %1851 = vmatprep.subr.mxu0 0.0
    %1852 = vmatpush1.msra.mxu0 0.0
    %1853 = vmatprep.subr.mxu0 0.0
    %1854 = vmatpush1.msra.mxu0 0.0
    %1855 = vmatprep.mubr.f32.mxu0 0.0
    %v1856 = vand.u32 %v1679, 4294901760
    %1857 = vmatmul.mubr.f32.gmra.mrb[0].mxu0 %v1856
    %v1858 = vpop.f32.mrb[0].mxu0
    %v1859 = vadd.f32 %v1763, %v1858
    %v1860 = vpop.f32.mrb[0].mxu0
    %1861 = vmatprep.mubr.f32.mxu0 0.0
    %v1862 = vand.u32 %v1682, 4294901760
    %1863 = vmatmul.mubr.f32.gmra.mrb[0].mxu0 %v1862
    %v1864 = vpop.f32.mrb[0].mxu0
    %v1865 = vadd.f32 %v1773, %v1864
    %v1866 = vpop.f32.mrb[0].mxu0
    %1867 = vmatprep.mubr.f32.mxu0 0.0
    %v1868 = vand.u32 %v1685, 4294901760
    %1869 = vmatmul.mubr.f32.gmra.mrb[0].mxu0 %v1868
    %v1870 = vpop.f32.mrb[0].mxu0
    %v1871 = vadd.f32 %v1783, %v1870
    %v1872 = vpop.f32.mrb[0].mxu0
    %1873 = vdwg.mxu0
    %1874 = vmatprep.subr.mxu0 0.0
    %v1875 = vand.u32 %v1688, 4294901760
    %v1876 = vsub.f32 %v1688, %v1875
    %1877 = vmatpush1.msra.mxu0 %v1876
    %1878 = vmatprep.subr.mxu0 0.0
    %1879 = vmatpush1.msra.mxu0 0.0
    %1880 = vmatprep.subr.mxu0 0.0
    %1881 = vmatpush1.msra.mxu0 0.0
    %1882 = vmatprep.subr.mxu0 0.0
    %1883 = vmatpush1.msra.mxu0 0.0
    %1884 = vmatprep.subr.mxu0 0.0
    %1885 = vmatpush1.msra.mxu0 0.0
    %1886 = vmatprep.subr.mxu0 0.0
    %1887 = vmatpush1.msra.mxu0 0.0
    %1888 = vmatprep.subr.mxu0 0.0
    %1889 = vmatpush1.msra.mxu0 0.0
    %1890 = vmatprep.subr.mxu0 0.0
    %1891 = vmatpush1.msra.mxu0 0.0
    %1892 = vmatprep.subr.mxu0 0.0
    %1893 = vmatpush1.msra.mxu0 0.0
    %1894 = vmatprep.subr.mxu0 0.0
    %1895 = vmatpush1.msra.mxu0 0.0
    %1896 = vmatprep.subr.mxu0 0.0
    %1897 = vmatpush1.msra.mxu0 0.0
    %1898 = vmatprep.subr.mxu0 0.0
    %1899 = vmatpush1.msra.mxu0 0.0
    %1900 = vmatprep.subr.mxu0 0.0
    %1901 = vmatpush1.msra.mxu0 0.0
    %1902 = vmatprep.subr.mxu0 0.0
    %1903 = vmatpush1.msra.mxu0 0.0
    %1904 = vmatprep.subr.mxu0 0.0
    %1905 = vmatpush1.msra.mxu0 0.0
    %1906 = vmatprep.subr.mxu0 0.0
    %1907 = vmatpush1.msra.mxu0 0.0
    %1908 = vmatprep.subr.mxu0 0.0
    %1909 = vmatpush1.msra.mxu0 0.0
    %1910 = vmatprep.subr.mxu0 0.0
    %1911 = vmatpush1.msra.mxu0 0.0
    %1912 = vmatprep.subr.mxu0 0.0
    %1913 = vmatpush1.msra.mxu0 0.0
    %1914 = vmatprep.subr.mxu0 0.0
    %1915 = vmatpush1.msra.mxu0 0.0
    %1916 = vmatprep.subr.mxu0 0.0
    %1917 = vmatpush1.msra.mxu0 0.0
    %1918 = vmatprep.subr.mxu0 0.0
    %1919 = vmatpush1.msra.mxu0 0.0
    %1920 = vmatprep.subr.mxu0 0.0
    %1921 = vmatpush1.msra.mxu0 0.0
    %1922 = vmatprep.subr.mxu0 0.0
    %1923 = vmatpush1.msra.mxu0 0.0
    %1924 = vmatprep.subr.mxu0 0.0
    %1925 = vmatpush1.msra.mxu0 0.0
    %1926 = vmatprep.subr.mxu0 0.0
    %1927 = vmatpush1.msra.mxu0 0.0
    %1928 = vmatprep.subr.mxu0 0.0
    %1929 = vmatpush1.msra.mxu0 0.0
    %1930 = vmatprep.subr.mxu0 0.0
    %1931 = vmatpush1.msra.mxu0 0.0
    %1932 = vmatprep.subr.mxu0 0.0
    %1933 = vmatpush1.msra.mxu0 0.0
    %1934 = vmatprep.subr.mxu0 0.0
    %1935 = vmatpush1.msra.mxu0 0.0
    %1936 = vmatprep.subr.mxu0 0.0
    %1937 = vmatpush1.msra.mxu0 0.0
    %1938 = vmatprep.subr.mxu0 0.0
    %1939 = vmatpush1.msra.mxu0 0.0
    %1940 = vmatprep.mubr.f32.mxu0 0.0
    %v1941 = vand.u32 %v1679, 4294901760
    %v1942 = vsub.f32 %v1679, %v1941
    %1943 = vmatmul.mubr.f32.gmra.mrb[0].mxu0 %v1942
    %v1944 = vpop.f32.mrb[0].mxu0
    %v1945 = vadd.f32 %v1859, %v1944
    %v1946 = vpop.f32.mrb[0].mxu0
    %1947 = vmatprep.mubr.f32.mxu0 0.0
    %v1948 = vand.u32 %v1682, 4294901760
    %v1949 = vsub.f32 %v1682, %v1948
    %1950 = vmatmul.mubr.f32.gmra.mrb[0].mxu0 %v1949
    %v1951 = vpop.f32.mrb[0].mxu0
    %v1952 = vadd.f32 %v1865, %v1951
    %v1953 = vpop.f32.mrb[0].mxu0
    %1954 = vmatprep.mubr.f32.mxu0 0.0
    %v1955 = vand.u32 %v1685, 4294901760
    %v1956 = vsub.f32 %v1685, %v1955
    %1957 = vmatmul.mubr.f32.gmra.mrb[0].mxu0 %v1956
    %v1958 = vpop.f32.mrb[0].mxu0
    %v1959 = vadd.f32 %v1871, %v1958
    %v1960 = vpop.f32.mrb[0].mxu0
    %1961 = vdwg.mxu0
    %1962 = vmatprep.subr.mxu0 0.0
    %v1963 = vand.u32 %v1688, 4294901760
    %1964 = vmatpush1.msra.mxu0 %v1963
    %1965 = vmatprep.subr.mxu0 0.0
    %1966 = vmatpush1.msra.mxu0 0.0
    %1967 = vmatprep.subr.mxu0 0.0
    %1968 = vmatpush1.msra.mxu0 0.0
    %1969 = vmatprep.subr.mxu0 0.0
    %1970 = vmatpush1.msra.mxu0 0.0
    %1971 = vmatprep.subr.mxu0 0.0
    %1972 = vmatpush1.msra.mxu0 0.0
    %1973 = vmatprep.subr.mxu0 0.0
    %1974 = vmatpush1.msra.mxu0 0.0
    %1975 = vmatprep.subr.mxu0 0.0
    %1976 = vmatpush1.msra.mxu0 0.0
    %1977 = vmatprep.subr.mxu0 0.0
    %1978 = vmatpush1.msra.mxu0 0.0
    %1979 = vmatprep.subr.mxu0 0.0
    %1980 = vmatpush1.msra.mxu0 0.0
    %1981 = vmatprep.subr.mxu0 0.0
    %1982 = vmatpush1.msra.mxu0 0.0
    %1983 = vmatprep.subr.mxu0 0.0
    %1984 = vmatpush1.msra.mxu0 0.0
    %1985 = vmatprep.subr.mxu0 0.0
    %1986 = vmatpush1.msra.mxu0 0.0
    %1987 = vmatprep.subr.mxu0 0.0
    %1988 = vmatpush1.msra.mxu0 0.0
    %1989 = vmatprep.subr.mxu0 0.0
    %1990 = vmatpush1.msra.mxu0 0.0
    %1991 = vmatprep.subr.mxu0 0.0
    %1992 = vmatpush1.msra.mxu0 0.0
    %1993 = vmatprep.subr.mxu0 0.0
    %1994 = vmatpush1.msra.mxu0 0.0
    %1995 = vmatprep.subr.mxu0 0.0
    %1996 = vmatpush1.msra.mxu0 0.0
    %1997 = vmatprep.subr.mxu0 0.0
    %1998 = vmatpush1.msra.mxu0 0.0
    %1999 = vmatprep.subr.mxu0 0.0
    %2000 = vmatpush1.msra.mxu0 0.0
    %2001 = vmatprep.subr.mxu0 0.0
    %2002 = vmatpush1.msra.mxu0 0.0
    %2003 = vmatprep.subr.mxu0 0.0
    %2004 = vmatpush1.msra.mxu0 0.0
    %2005 = vmatprep.subr.mxu0 0.0
    %2006 = vmatpush1.msra.mxu0 0.0
    %2007 = vmatprep.subr.mxu0 0.0
    %2008 = vmatpush1.msra.mxu0 0.0
    %2009 = vmatprep.subr.mxu0 0.0
    %2010 = vmatpush1.msra.mxu0 0.0
    %2011 = vmatprep.subr.mxu0 0.0
    %2012 = vmatpush1.msra.mxu0 0.0
    %2013 = vmatprep.subr.mxu0 0.0
    %2014 = vmatpush1.msra.mxu0 0.0
    %2015 = vmatprep.subr.mxu0 0.0
    %2016 = vmatpush1.msra.mxu0 0.0
    %2017 = vmatprep.subr.mxu0 0.0
    %2018 = vmatpush1.msra.mxu0 0.0
    %2019 = vmatprep.subr.mxu0 0.0
    %2020 = vmatpush1.msra.mxu0 0.0
    %2021 = vmatprep.subr.mxu0 0.0
    %2022 = vmatpush1.msra.mxu0 0.0
    %2023 = vmatprep.subr.mxu0 0.0
    %2024 = vmatpush1.msra.mxu0 0.0
    %2025 = vmatprep.subr.mxu0 0.0
    %2026 = vmatpush1.msra.mxu0 0.0
    %2027 = vmatprep.mubr.f32.mxu0 0.0
    %v2028 = vand.u32 %v1679, 4294901760
    %v2029 = vsub.f32 %v1679, %v2028
    %v2030 = vand.u32 %v2029, 4294901760
    %2031 = vmatmul.mubr.f32.gmra.mrb[0].mxu0 %v2030
    %v2032 = vpop.f32.mrb[0].mxu0
    %v2033 = vadd.f32 %v1945, %v2032
    %v2034 = vpop.f32.mrb[0].mxu0
    %2035 = vmatprep.mubr.f32.mxu0 0.0
    %v2036 = vand.u32 %v1682, 4294901760
    %v2037 = vsub.f32 %v1682, %v2036
    %v2038 = vand.u32 %v2037, 4294901760
    %2039 = vmatmul.mubr.f32.gmra.mrb[0].mxu0 %v2038
    %v2040 = vpop.f32.mrb[0].mxu0
    %v2041 = vadd.f32 %v1952, %v2040
    %v2042 = vpop.f32.mrb[0].mxu0
    %2043 = vmatprep.mubr.f32.mxu0 0.0
    %v2044 = vand.u32 %v1685, 4294901760
    %v2045 = vsub.f32 %v1685, %v2044
    %v2046 = vand.u32 %v2045, 4294901760
    %2047 = vmatmul.mubr.f32.gmra.mrb[0].mxu0 %v2046
    %v2048 = vpop.f32.mrb[0].mxu0
    %v2049 = vadd.f32 %v1959, %v2048
    %v2050 = vpop.f32.mrb[0].mxu0
    %2051 = vdwg.mxu0
    %2052 = vmatprep.subr.mxu0 0.0
    %v2053 = vand.u32 %v1688, 4294901760
    %v2054 = vsub.f32 %v1688, %v2053
    %v2055 = vand.u32 %v2054, 4294901760
    %2056 = vmatpush1.msra.mxu0 %v2055
    %2057 = vmatprep.subr.mxu0 0.0
    %2058 = vmatpush1.msra.mxu0 0.0
    %2059 = vmatprep.subr.mxu0 0.0
    %2060 = vmatpush1.msra.mxu0 0.0
    %2061 = vmatprep.subr.mxu0 0.0
    %2062 = vmatpush1.msra.mxu0 0.0
    %2063 = vmatprep.subr.mxu0 0.0
    %2064 = vmatpush1.msra.mxu0 0.0
    %2065 = vmatprep.subr.mxu0 0.0
    %2066 = vmatpush1.msra.mxu0 0.0
    %2067 = vmatprep.subr.mxu0 0.0
    %2068 = vmatpush1.msra.mxu0 0.0
    %2069 = vmatprep.subr.mxu0 0.0
    %2070 = vmatpush1.msra.mxu0 0.0
    %2071 = vmatprep.subr.mxu0 0.0
    %2072 = vmatpush1.msra.mxu0 0.0
    %2073 = vmatprep.subr.mxu0 0.0
    %2074 = vmatpush1.msra.mxu0 0.0
    %2075 = vmatprep.subr.mxu0 0.0
    %2076 = vmatpush1.msra.mxu0 0.0
    %2077 = vmatprep.subr.mxu0 0.0
    %2078 = vmatpush1.msra.mxu0 0.0
    %2079 = vmatprep.subr.mxu0 0.0
    %2080 = vmatpush1.msra.mxu0 0.0
    %2081 = vmatprep.subr.mxu0 0.0
    %2082 = vmatpush1.msra.mxu0 0.0
    %2083 = vmatprep.subr.mxu0 0.0
    %2084 = vmatpush1.msra.mxu0 0.0
    %2085 = vmatprep.subr.mxu0 0.0
    %2086 = vmatpush1.msra.mxu0 0.0
    %2087 = vmatprep.subr.mxu0 0.0
    %2088 = vmatpush1.msra.mxu0 0.0
    %2089 = vmatprep.subr.mxu0 0.0
    %2090 = vmatpush1.msra.mxu0 0.0
    %2091 = vmatprep.subr.mxu0 0.0
    %2092 = vmatpush1.msra.mxu0 0.0
    %2093 = vmatprep.subr.mxu0 0.0
    %2094 = vmatpush1.msra.mxu0 0.0
    %2095 = vmatprep.subr.mxu0 0.0
    %2096 = vmatpush1.msra.mxu0 0.0
    %2097 = vmatprep.subr.mxu0 0.0
    %2098 = vmatpush1.msra.mxu0 0.0
    %2099 = vmatprep.subr.mxu0 0.0
    %2100 = vmatpush1.msra.mxu0 0.0
    %2101 = vmatprep.subr.mxu0 0.0
    %2102 = vmatpush1.msra.mxu0 0.0
    %2103 = vmatprep.subr.mxu0 0.0
    %2104 = vmatpush1.msra.mxu0 0.0
    %2105 = vmatprep.subr.mxu0 0.0
    %2106 = vmatpush1.msra.mxu0 0.0
    %2107 = vmatprep.subr.mxu0 0.0
    %2108 = vmatpush1.msra.mxu0 0.0
    %2109 = vmatprep.subr.mxu0 0.0
    %2110 = vmatpush1.msra.mxu0 0.0
    %2111 = vmatprep.subr.mxu0 0.0
    %2112 = vmatpush1.msra.mxu0 0.0
    %2113 = vmatprep.subr.mxu0 0.0
    %2114 = vmatpush1.msra.mxu0 0.0
    %2115 = vmatprep.subr.mxu0 0.0
    %2116 = vmatpush1.msra.mxu0 0.0
    %2117 = vmatprep.subr.mxu0 0.0
    %2118 = vmatpush1.msra.mxu0 0.0
    %2119 = vmatprep.mubr.f32.mxu0 0.0
    %v2120 = vand.u32 %v1679, 4294901760
    %2121 = vmatmul.mubr.f32.gmra.mrb[0].mxu0 %v2120
    %v2122 = vpop.f32.mrb[0].mxu0
    %v2123 = vadd.f32 %v2033, %v2122
    %v2124 = vpop.f32.mrb[0].mxu0
    %2125 = vmatprep.mubr.f32.mxu0 0.0
    %v2126 = vand.u32 %v1682, 4294901760
    %2127 = vmatmul.mubr.f32.gmra.mrb[0].mxu0 %v2126
    %v2128 = vpop.f32.mrb[0].mxu0
    %v2129 = vadd.f32 %v2041, %v2128
    %v2130 = vpop.f32.mrb[0].mxu0
    %2131 = vmatprep.mubr.f32.mxu0 0.0
    %v2132 = vand.u32 %v1685, 4294901760
    %2133 = vmatmul.mubr.f32.gmra.mrb[0].mxu0 %v2132
    %v2134 = vpop.f32.mrb[0].mxu0
    %v2135 = vadd.f32 %v2049, %v2134
    %v2136 = vpop.f32.mrb[0].mxu0
    %2137 = vdwg.mxu0
    %2138 = vmatprep.subr.mxu0 0.0
    %v2139 = vand.u32 %v1688, 4294901760
    %2140 = vmatpush1.msra.mxu0 %v2139
    %2141 = vmatprep.subr.mxu0 0.0
    %2142 = vmatpush1.msra.mxu0 0.0
    %2143 = vmatprep.subr.mxu0 0.0
    %2144 = vmatpush1.msra.mxu0 0.0
    %2145 = vmatprep.subr.mxu0 0.0
    %2146 = vmatpush1.msra.mxu0 0.0
    %2147 = vmatprep.subr.mxu0 0.0
    %2148 = vmatpush1.msra.mxu0 0.0
    %2149 = vmatprep.subr.mxu0 0.0
    %2150 = vmatpush1.msra.mxu0 0.0
    %2151 = vmatprep.subr.mxu0 0.0
    %2152 = vmatpush1.msra.mxu0 0.0
    %2153 = vmatprep.subr.mxu0 0.0
    %2154 = vmatpush1.msra.mxu0 0.0
    %2155 = vmatprep.subr.mxu0 0.0
    %2156 = vmatpush1.msra.mxu0 0.0
    %2157 = vmatprep.subr.mxu0 0.0
    %2158 = vmatpush1.msra.mxu0 0.0
    %2159 = vmatprep.subr.mxu0 0.0
    %2160 = vmatpush1.msra.mxu0 0.0
    %2161 = vmatprep.subr.mxu0 0.0
    %2162 = vmatpush1.msra.mxu0 0.0
    %2163 = vmatprep.subr.mxu0 0.0
    %2164 = vmatpush1.msra.mxu0 0.0
    %2165 = vmatprep.subr.mxu0 0.0
    %2166 = vmatpush1.msra.mxu0 0.0
    %2167 = vmatprep.subr.mxu0 0.0
    %2168 = vmatpush1.msra.mxu0 0.0
    %2169 = vmatprep.subr.mxu0 0.0
    %2170 = vmatpush1.msra.mxu0 0.0
    %2171 = vmatprep.subr.mxu0 0.0
    %2172 = vmatpush1.msra.mxu0 0.0
    %2173 = vmatprep.subr.mxu0 0.0
    %2174 = vmatpush1.msra.mxu0 0.0
    %2175 = vmatprep.subr.mxu0 0.0
    %2176 = vmatpush1.msra.mxu0 0.0
    %2177 = vmatprep.subr.mxu0 0.0
    %2178 = vmatpush1.msra.mxu0 0.0
    %2179 = vmatprep.subr.mxu0 0.0
    %2180 = vmatpush1.msra.mxu0 0.0
    %2181 = vmatprep.subr.mxu0 0.0
    %2182 = vmatpush1.msra.mxu0 0.0
    %2183 = vmatprep.subr.mxu0 0.0
    %2184 = vmatpush1.msra.mxu0 0.0
    %2185 = vmatprep.subr.mxu0 0.0
    %2186 = vmatpush1.msra.mxu0 0.0
    %2187 = vmatprep.subr.mxu0 0.0
    %2188 = vmatpush1.msra.mxu0 0.0
    %2189 = vmatprep.subr.mxu0 0.0
    %2190 = vmatpush1.msra.mxu0 0.0
    %2191 = vmatprep.subr.mxu0 0.0
    %2192 = vmatpush1.msra.mxu0 0.0
    %2193 = vmatprep.subr.mxu0 0.0
    %2194 = vmatpush1.msra.mxu0 0.0
    %2195 = vmatprep.subr.mxu0 0.0
    %2196 = vmatpush1.msra.mxu0 0.0
    %2197 = vmatprep.subr.mxu0 0.0
    %2198 = vmatpush1.msra.mxu0 0.0
    %2199 = vmatprep.subr.mxu0 0.0
    %2200 = vmatpush1.msra.mxu0 0.0
    %2201 = vmatprep.subr.mxu0 0.0
    %2202 = vmatpush1.msra.mxu0 0.0
    %2203 = vmatprep.mubr.f32.mxu0 0.0
    %v2204 = vand.u32 %v1679, 4294901760
    %2205 = vmatmul.mubr.f32.gmra.mrb[0].mxu0 %v2204
    %v2206 = vpop.f32.mrb[0].mxu0
    %v2207 = vadd.f32 %v2123, %v2206
    %v2208 = vpop.f32.mrb[0].mxu0
    %2209 = vmatprep.mubr.f32.mxu0 0.0
    %v2210 = vand.u32 %v1682, 4294901760
    %2211 = vmatmul.mubr.f32.gmra.mrb[0].mxu0 %v2210
    %v2212 = vpop.f32.mrb[0].mxu0
    %v2213 = vadd.f32 %v2129, %v2212
    %v2214 = vpop.f32.mrb[0].mxu0
    %2215 = vmatprep.mubr.f32.mxu0 0.0
    %v2216 = vand.u32 %v1685, 4294901760
    %2217 = vmatmul.mubr.f32.gmra.mrb[0].mxu0 %v2216
    %v2218 = vpop.f32.mrb[0].mxu0
    %v2219 = vadd.f32 %v2135, %v2218
    %v2220 = vpop.f32.mrb[0].mxu0
    %2221 = vdwg.mxu0
    %v2223 = vsel %vm28, %v15, 0
    %v2226 = vsel %vm28, %v16, 0
    %v2229 = vsel %vm28, %v17, 0
    %2231 = vmatprep.subr.mxu0 0.0
    %v2232 = vand.u32 %v1688, 4294901760
    %2233 = vmatpush1.msra.mxu0 %v2232
    %2234 = vmatprep.subr.mxu0 0.0
    %2235 = vmatpush1.msra.mxu0 0.0
    %2236 = vmatprep.subr.mxu0 0.0
    %2237 = vmatpush1.msra.mxu0 0.0
    %2238 = vmatprep.subr.mxu0 0.0
    %2239 = vmatpush1.msra.mxu0 0.0
    %2240 = vmatprep.subr.mxu0 0.0
    %2241 = vmatpush1.msra.mxu0 0.0
    %2242 = vmatprep.subr.mxu0 0.0
    %2243 = vmatpush1.msra.mxu0 0.0
    %2244 = vmatprep.subr.mxu0 0.0
    %2245 = vmatpush1.msra.mxu0 0.0
    %2246 = vmatprep.subr.mxu0 0.0
    %2247 = vmatpush1.msra.mxu0 0.0
    %2248 = vmatprep.subr.mxu0 0.0
    %2249 = vmatpush1.msra.mxu0 0.0
    %2250 = vmatprep.subr.mxu0 0.0
    %2251 = vmatpush1.msra.mxu0 0.0
    %2252 = vmatprep.subr.mxu0 0.0
    %2253 = vmatpush1.msra.mxu0 0.0
    %2254 = vmatprep.subr.mxu0 0.0
    %2255 = vmatpush1.msra.mxu0 0.0
    %2256 = vmatprep.subr.mxu0 0.0
    %2257 = vmatpush1.msra.mxu0 0.0
    %2258 = vmatprep.subr.mxu0 0.0
    %2259 = vmatpush1.msra.mxu0 0.0
    %2260 = vmatprep.subr.mxu0 0.0
    %2261 = vmatpush1.msra.mxu0 0.0
    %2262 = vmatprep.subr.mxu0 0.0
    %2263 = vmatpush1.msra.mxu0 0.0
    %2264 = vmatprep.subr.mxu0 0.0
    %2265 = vmatpush1.msra.mxu0 0.0
    %2266 = vmatprep.subr.mxu0 0.0
    %2267 = vmatpush1.msra.mxu0 0.0
    %2268 = vmatprep.subr.mxu0 0.0
    %2269 = vmatpush1.msra.mxu0 0.0
    %2270 = vmatprep.subr.mxu0 0.0
    %2271 = vmatpush1.msra.mxu0 0.0
    %2272 = vmatprep.subr.mxu0 0.0
    %2273 = vmatpush1.msra.mxu0 0.0
    %2274 = vmatprep.subr.mxu0 0.0
    %2275 = vmatpush1.msra.mxu0 0.0
    %2276 = vmatprep.subr.mxu0 0.0
    %2277 = vmatpush1.msra.mxu0 0.0
    %2278 = vmatprep.subr.mxu0 0.0
    %2279 = vmatpush1.msra.mxu0 0.0
    %2280 = vmatprep.subr.mxu0 0.0
    %2281 = vmatpush1.msra.mxu0 0.0
    %2282 = vmatprep.subr.mxu0 0.0
    %2283 = vmatpush1.msra.mxu0 0.0
    %2284 = vmatprep.subr.mxu0 0.0
    %2285 = vmatpush1.msra.mxu0 0.0
    %2286 = vmatprep.subr.mxu0 0.0
    %2287 = vmatpush1.msra.mxu0 0.0
    %2288 = vmatprep.subr.mxu0 0.0
    %2289 = vmatpush1.msra.mxu0 0.0
    %2290 = vmatprep.subr.mxu0 0.0
    %2291 = vmatpush1.msra.mxu0 0.0
    %2292 = vmatprep.subr.mxu0 0.0
    %2293 = vmatpush1.msra.mxu0 0.0
    %2294 = vmatprep.subr.mxu0 0.0
    %2295 = vmatpush1.msra.mxu0 0.0
    %2296 = vmatprep.mubr.f32.mxu0 0.0
    %v2297 = vand.u32 %v2223, 4294901760
    %v2298 = vsub.f32 %v2223, %v2297
    %v2299 = vand.u32 %v2298, 4294901760
    %v2300 = vsub.f32 %v2298, %v2299
    %v2301 = vand.u32 %v2300, 4294901760
    %2302 = vmatmul.mubr.f32.gmra.mrb[0].mxu0 %v2301
    %v2303 = vpop.f32.mrb[0].mxu0
    %v2304 = vadd.f32 %v1677, %v2303
    %v2305 = vpop.f32.mrb[0].mxu0
    %2306 = vmatprep.mubr.f32.mxu0 0.0
    %v2307 = vand.u32 %v2226, 4294901760
    %v2308 = vsub.f32 %v2226, %v2307
    %v2309 = vand.u32 %v2308, 4294901760
    %v2310 = vsub.f32 %v2308, %v2309
    %v2311 = vand.u32 %v2310, 4294901760
    %2312 = vmatmul.mubr.f32.gmra.mrb[0].mxu0 %v2311
    %v2313 = vpop.f32.mrb[0].mxu0
    %v2314 = vadd.f32 %v1677, %v2313
    %v2315 = vpop.f32.mrb[0].mxu0
    %2316 = vmatprep.mubr.f32.mxu0 0.0
    %v2317 = vand.u32 %v2229, 4294901760
    %v2318 = vsub.f32 %v2229, %v2317
    %v2319 = vand.u32 %v2318, 4294901760
    %v2320 = vsub.f32 %v2318, %v2319
    %v2321 = vand.u32 %v2320, 4294901760
    %2322 = vmatmul.mubr.f32.gmra.mrb[0].mxu0 %v2321
    %v2323 = vpop.f32.mrb[0].mxu0
    %v2324 = vadd.f32 %v1677, %v2323
    %v2325 = vpop.f32.mrb[0].mxu0
    %2326 = vdwg.mxu0
    %2327 = vmatprep.subr.mxu0 0.0
    %v2328 = vand.u32 %v1688, 4294901760
    %v2329 = vsub.f32 %v1688, %v2328
    %v2330 = vand.u32 %v2329, 4294901760
    %v2331 = vsub.f32 %v2329, %v2330
    %v2332 = vand.u32 %v2331, 4294901760
    %2333 = vmatpush1.msra.mxu0 %v2332
    %2334 = vmatprep.subr.mxu0 0.0
    %2335 = vmatpush1.msra.mxu0 0.0
    %2336 = vmatprep.subr.mxu0 0.0
    %2337 = vmatpush1.msra.mxu0 0.0
    %2338 = vmatprep.subr.mxu0 0.0
    %2339 = vmatpush1.msra.mxu0 0.0
    %2340 = vmatprep.subr.mxu0 0.0
    %2341 = vmatpush1.msra.mxu0 0.0
    %2342 = vmatprep.subr.mxu0 0.0
    %2343 = vmatpush1.msra.mxu0 0.0
    %2344 = vmatprep.subr.mxu0 0.0
    %2345 = vmatpush1.msra.mxu0 0.0
    %2346 = vmatprep.subr.mxu0 0.0
    %2347 = vmatpush1.msra.mxu0 0.0
    %2348 = vmatprep.subr.mxu0 0.0
    %2349 = vmatpush1.msra.mxu0 0.0
    %2350 = vmatprep.subr.mxu0 0.0
    %2351 = vmatpush1.msra.mxu0 0.0
    %2352 = vmatprep.subr.mxu0 0.0
    %2353 = vmatpush1.msra.mxu0 0.0
    %2354 = vmatprep.subr.mxu0 0.0
    %2355 = vmatpush1.msra.mxu0 0.0
    %2356 = vmatprep.subr.mxu0 0.0
    %2357 = vmatpush1.msra.mxu0 0.0
    %2358 = vmatprep.subr.mxu0 0.0
    %2359 = vmatpush1.msra.mxu0 0.0
    %2360 = vmatprep.subr.mxu0 0.0
    %2361 = vmatpush1.msra.mxu0 0.0
    %2362 = vmatprep.subr.mxu0 0.0
    %2363 = vmatpush1.msra.mxu0 0.0
    %2364 = vmatprep.subr.mxu0 0.0
    %2365 = vmatpush1.msra.mxu0 0.0
    %2366 = vmatprep.subr.mxu0 0.0
    %2367 = vmatpush1.msra.mxu0 0.0
    %2368 = vmatprep.subr.mxu0 0.0
    %2369 = vmatpush1.msra.mxu0 0.0
    %2370 = vmatprep.subr.mxu0 0.0
    %2371 = vmatpush1.msra.mxu0 0.0
    %2372 = vmatprep.subr.mxu0 0.0
    %2373 = vmatpush1.msra.mxu0 0.0
    %2374 = vmatprep.subr.mxu0 0.0
    %2375 = vmatpush1.msra.mxu0 0.0
    %2376 = vmatprep.subr.mxu0 0.0
    %2377 = vmatpush1.msra.mxu0 0.0
    %2378 = vmatprep.subr.mxu0 0.0
    %2379 = vmatpush1.msra.mxu0 0.0
    %2380 = vmatprep.subr.mxu0 0.0
    %2381 = vmatpush1.msra.mxu0 0.0
    %2382 = vmatprep.subr.mxu0 0.0
    %2383 = vmatpush1.msra.mxu0 0.0
    %2384 = vmatprep.subr.mxu0 0.0
    %2385 = vmatpush1.msra.mxu0 0.0
    %2386 = vmatprep.subr.mxu0 0.0
    %2387 = vmatpush1.msra.mxu0 0.0
    %2388 = vmatprep.subr.mxu0 0.0
    %2389 = vmatpush1.msra.mxu0 0.0
    %2390 = vmatprep.subr.mxu0 0.0
    %2391 = vmatpush1.msra.mxu0 0.0
    %2392 = vmatprep.subr.mxu0 0.0
    %2393 = vmatpush1.msra.mxu0 0.0
    %2394 = vmatprep.subr.mxu0 0.0
    %2395 = vmatpush1.msra.mxu0 0.0
    %2396 = vmatprep.mubr.f32.mxu0 0.0
    %v2397 = vand.u32 %v2223, 4294901760
    %2398 = vmatmul.mubr.f32.gmra.mrb[0].mxu0 %v2397
    %v2399 = vpop.f32.mrb[0].mxu0
    %v2400 = vadd.f32 %v2304, %v2399
    %v2401 = vpop.f32.mrb[0].mxu0
    %2402 = vmatprep.mubr.f32.mxu0 0.0
    %v2403 = vand.u32 %v2226, 4294901760
    %2404 = vmatmul.mubr.f32.gmra.mrb[0].mxu0 %v2403
    %v2405 = vpop.f32.mrb[0].mxu0
    %v2406 = vadd.f32 %v2314, %v2405
    %v2407 = vpop.f32.mrb[0].mxu0
    %2408 = vmatprep.mubr.f32.mxu0 0.0
    %v2409 = vand.u32 %v2229, 4294901760
    %2410 = vmatmul.mubr.f32.gmra.mrb[0].mxu0 %v2409
    %v2411 = vpop.f32.mrb[0].mxu0
    %v2412 = vadd.f32 %v2324, %v2411
    %v2413 = vpop.f32.mrb[0].mxu0
    %2414 = vdwg.mxu0
    %2415 = vmatprep.subr.mxu0 0.0
    %v2416 = vand.u32 %v1688, 4294901760
    %v2417 = vsub.f32 %v1688, %v2416
    %2418 = vmatpush1.msra.mxu0 %v2417
    %2419 = vmatprep.subr.mxu0 0.0
    %2420 = vmatpush1.msra.mxu0 0.0
    %2421 = vmatprep.subr.mxu0 0.0
    %2422 = vmatpush1.msra.mxu0 0.0
    %2423 = vmatprep.subr.mxu0 0.0
    %2424 = vmatpush1.msra.mxu0 0.0
    %2425 = vmatprep.subr.mxu0 0.0
    %2426 = vmatpush1.msra.mxu0 0.0
    %2427 = vmatprep.subr.mxu0 0.0
    %2428 = vmatpush1.msra.mxu0 0.0
    %2429 = vmatprep.subr.mxu0 0.0
    %2430 = vmatpush1.msra.mxu0 0.0
    %2431 = vmatprep.subr.mxu0 0.0
    %2432 = vmatpush1.msra.mxu0 0.0
    %2433 = vmatprep.subr.mxu0 0.0
    %2434 = vmatpush1.msra.mxu0 0.0
    %2435 = vmatprep.subr.mxu0 0.0
    %2436 = vmatpush1.msra.mxu0 0.0
    %2437 = vmatprep.subr.mxu0 0.0
    %2438 = vmatpush1.msra.mxu0 0.0
    %2439 = vmatprep.subr.mxu0 0.0
    %2440 = vmatpush1.msra.mxu0 0.0
    %2441 = vmatprep.subr.mxu0 0.0
    %2442 = vmatpush1.msra.mxu0 0.0
    %2443 = vmatprep.subr.mxu0 0.0
    %2444 = vmatpush1.msra.mxu0 0.0
    %2445 = vmatprep.subr.mxu0 0.0
    %2446 = vmatpush1.msra.mxu0 0.0
    %2447 = vmatprep.subr.mxu0 0.0
    %2448 = vmatpush1.msra.mxu0 0.0
    %2449 = vmatprep.subr.mxu0 0.0
    %2450 = vmatpush1.msra.mxu0 0.0
    %2451 = vmatprep.subr.mxu0 0.0
    %2452 = vmatpush1.msra.mxu0 0.0
    %2453 = vmatprep.subr.mxu0 0.0
    %2454 = vmatpush1.msra.mxu0 0.0
    %2455 = vmatprep.subr.mxu0 0.0
    %2456 = vmatpush1.msra.mxu0 0.0
    %2457 = vmatprep.subr.mxu0 0.0
    %2458 = vmatpush1.msra.mxu0 0.0
    %2459 = vmatprep.subr.mxu0 0.0
    %2460 = vmatpush1.msra.mxu0 0.0
    %2461 = vmatprep.subr.mxu0 0.0
    %2462 = vmatpush1.msra.mxu0 0.0
    %2463 = vmatprep.subr.mxu0 0.0
    %2464 = vmatpush1.msra.mxu0 0.0
    %2465 = vmatprep.subr.mxu0 0.0
    %2466 = vmatpush1.msra.mxu0 0.0
    %2467 = vmatprep.subr.mxu0 0.0
    %2468 = vmatpush1.msra.mxu0 0.0
    %2469 = vmatprep.subr.mxu0 0.0
    %2470 = vmatpush1.msra.mxu0 0.0
    %2471 = vmatprep.subr.mxu0 0.0
    %2472 = vmatpush1.msra.mxu0 0.0
    %2473 = vmatprep.subr.mxu0 0.0
    %2474 = vmatpush1.msra.mxu0 0.0
    %2475 = vmatprep.subr.mxu0 0.0
    %2476 = vmatpush1.msra.mxu0 0.0
    %2477 = vmatprep.subr.mxu0 0.0
    %2478 = vmatpush1.msra.mxu0 0.0
    %2479 = vmatprep.subr.mxu0 0.0
    %2480 = vmatpush1.msra.mxu0 0.0
    %2481 = vmatprep.mubr.f32.mxu0 0.0
    %v2482 = vand.u32 %v2223, 4294901760
    %v2483 = vsub.f32 %v2223, %v2482
    %2484 = vmatmul.mubr.f32.gmra.mrb[0].mxu0 %v2483
    %v2485 = vpop.f32.mrb[0].mxu0
    %v2486 = vadd.f32 %v2400, %v2485
    %v2487 = vpop.f32.mrb[0].mxu0
    %2488 = vmatprep.mubr.f32.mxu0 0.0
    %v2489 = vand.u32 %v2226, 4294901760
    %v2490 = vsub.f32 %v2226, %v2489
    %2491 = vmatmul.mubr.f32.gmra.mrb[0].mxu0 %v2490
    %v2492 = vpop.f32.mrb[0].mxu0
    %v2493 = vadd.f32 %v2406, %v2492
    %v2494 = vpop.f32.mrb[0].mxu0
    %2495 = vmatprep.mubr.f32.mxu0 0.0
    %v2496 = vand.u32 %v2229, 4294901760
    %v2497 = vsub.f32 %v2229, %v2496
    %2498 = vmatmul.mubr.f32.gmra.mrb[0].mxu0 %v2497
    %v2499 = vpop.f32.mrb[0].mxu0
    %v2500 = vadd.f32 %v2412, %v2499
    %v2501 = vpop.f32.mrb[0].mxu0
    %2502 = vdwg.mxu0
    %2503 = vmatprep.subr.mxu0 0.0
    %v2504 = vand.u32 %v1688, 4294901760
    %2505 = vmatpush1.msra.mxu0 %v2504
    %2506 = vmatprep.subr.mxu0 0.0
    %2507 = vmatpush1.msra.mxu0 0.0
    %2508 = vmatprep.subr.mxu0 0.0
    %2509 = vmatpush1.msra.mxu0 0.0
    %2510 = vmatprep.subr.mxu0 0.0
    %2511 = vmatpush1.msra.mxu0 0.0
    %2512 = vmatprep.subr.mxu0 0.0
    %2513 = vmatpush1.msra.mxu0 0.0
    %2514 = vmatprep.subr.mxu0 0.0
    %2515 = vmatpush1.msra.mxu0 0.0
    %2516 = vmatprep.subr.mxu0 0.0
    %2517 = vmatpush1.msra.mxu0 0.0
    %2518 = vmatprep.subr.mxu0 0.0
    %2519 = vmatpush1.msra.mxu0 0.0
    %2520 = vmatprep.subr.mxu0 0.0
    %2521 = vmatpush1.msra.mxu0 0.0
    %2522 = vmatprep.subr.mxu0 0.0
    %2523 = vmatpush1.msra.mxu0 0.0
    %2524 = vmatprep.subr.mxu0 0.0
    %2525 = vmatpush1.msra.mxu0 0.0
    %2526 = vmatprep.subr.mxu0 0.0
    %2527 = vmatpush1.msra.mxu0 0.0
    %2528 = vmatprep.subr.mxu0 0.0
    %2529 = vmatpush1.msra.mxu0 0.0
    %2530 = vmatprep.subr.mxu0 0.0
    %2531 = vmatpush1.msra.mxu0 0.0
    %2532 = vmatprep.subr.mxu0 0.0
    %2533 = vmatpush1.msra.mxu0 0.0
    %2534 = vmatprep.subr.mxu0 0.0
    %2535 = vmatpush1.msra.mxu0 0.0
    %2536 = vmatprep.subr.mxu0 0.0
    %2537 = vmatpush1.msra.mxu0 0.0
    %2538 = vmatprep.subr.mxu0 0.0
    %2539 = vmatpush1.msra.mxu0 0.0
    %2540 = vmatprep.subr.mxu0 0.0
    %2541 = vmatpush1.msra.mxu0 0.0
    %2542 = vmatprep.subr.mxu0 0.0
    %2543 = vmatpush1.msra.mxu0 0.0
    %2544 = vmatprep.subr.mxu0 0.0
    %2545 = vmatpush1.msra.mxu0 0.0
    %2546 = vmatprep.subr.mxu0 0.0
    %2547 = vmatpush1.msra.mxu0 0.0
    %2548 = vmatprep.subr.mxu0 0.0
    %2549 = vmatpush1.msra.mxu0 0.0
    %2550 = vmatprep.subr.mxu0 0.0
    %2551 = vmatpush1.msra.mxu0 0.0
    %2552 = vmatprep.subr.mxu0 0.0
    %2553 = vmatpush1.msra.mxu0 0.0
    %2554 = vmatprep.subr.mxu0 0.0
    %2555 = vmatpush1.msra.mxu0 0.0
    %2556 = vmatprep.subr.mxu0 0.0
    %2557 = vmatpush1.msra.mxu0 0.0
    %2558 = vmatprep.subr.mxu0 0.0
    %2559 = vmatpush1.msra.mxu0 0.0
    %2560 = vmatprep.subr.mxu0 0.0
    %2561 = vmatpush1.msra.mxu0 0.0
    %2562 = vmatprep.subr.mxu0 0.0
    %2563 = vmatpush1.msra.mxu0 0.0
    %2564 = vmatprep.subr.mxu0 0.0
    %2565 = vmatpush1.msra.mxu0 0.0
    %2566 = vmatprep.subr.mxu0 0.0
    %2567 = vmatpush1.msra.mxu0 0.0
    %2568 = vmatprep.mubr.f32.mxu0 0.0
    %v2569 = vand.u32 %v2223, 4294901760
    %v2570 = vsub.f32 %v2223, %v2569
    %v2571 = vand.u32 %v2570, 4294901760
    %2572 = vmatmul.mubr.f32.gmra.mrb[0].mxu0 %v2571
    %v2573 = vpop.f32.mrb[0].mxu0
    %v2574 = vadd.f32 %v2486, %v2573
    %v2575 = vpop.f32.mrb[0].mxu0
    %2576 = vmatprep.mubr.f32.mxu0 0.0
    %v2577 = vand.u32 %v2226, 4294901760
    %v2578 = vsub.f32 %v2226, %v2577
    %v2579 = vand.u32 %v2578, 4294901760
    %2580 = vmatmul.mubr.f32.gmra.mrb[0].mxu0 %v2579
    %v2581 = vpop.f32.mrb[0].mxu0
    %v2582 = vadd.f32 %v2493, %v2581
    %v2583 = vpop.f32.mrb[0].mxu0
    %2584 = vmatprep.mubr.f32.mxu0 0.0
    %v2585 = vand.u32 %v2229, 4294901760
    %v2586 = vsub.f32 %v2229, %v2585
    %v2587 = vand.u32 %v2586, 4294901760
    %2588 = vmatmul.mubr.f32.gmra.mrb[0].mxu0 %v2587
    %v2589 = vpop.f32.mrb[0].mxu0
    %v2590 = vadd.f32 %v2500, %v2589
    %v2591 = vpop.f32.mrb[0].mxu0
    %2592 = vdwg.mxu0
    %2593 = vmatprep.subr.mxu0 0.0
    %v2594 = vand.u32 %v1688, 4294901760
    %v2595 = vsub.f32 %v1688, %v2594
    %v2596 = vand.u32 %v2595, 4294901760
    %2597 = vmatpush1.msra.mxu0 %v2596
    %2598 = vmatprep.subr.mxu0 0.0
    %2599 = vmatpush1.msra.mxu0 0.0
    %2600 = vmatprep.subr.mxu0 0.0
    %2601 = vmatpush1.msra.mxu0 0.0
    %2602 = vmatprep.subr.mxu0 0.0
    %2603 = vmatpush1.msra.mxu0 0.0
    %2604 = vmatprep.subr.mxu0 0.0
    %2605 = vmatpush1.msra.mxu0 0.0
    %2606 = vmatprep.subr.mxu0 0.0
    %2607 = vmatpush1.msra.mxu0 0.0
    %2608 = vmatprep.subr.mxu0 0.0
    %2609 = vmatpush1.msra.mxu0 0.0
    %2610 = vmatprep.subr.mxu0 0.0
    %2611 = vmatpush1.msra.mxu0 0.0
    %2612 = vmatprep.subr.mxu0 0.0
    %2613 = vmatpush1.msra.mxu0 0.0
    %2614 = vmatprep.subr.mxu0 0.0
    %2615 = vmatpush1.msra.mxu0 0.0
    %2616 = vmatprep.subr.mxu0 0.0
    %2617 = vmatpush1.msra.mxu0 0.0
    %2618 = vmatprep.subr.mxu0 0.0
    %2619 = vmatpush1.msra.mxu0 0.0
    %2620 = vmatprep.subr.mxu0 0.0
    %2621 = vmatpush1.msra.mxu0 0.0
    %2622 = vmatprep.subr.mxu0 0.0
    %2623 = vmatpush1.msra.mxu0 0.0
    %2624 = vmatprep.subr.mxu0 0.0
    %2625 = vmatpush1.msra.mxu0 0.0
    %2626 = vmatprep.subr.mxu0 0.0
    %2627 = vmatpush1.msra.mxu0 0.0
    %2628 = vmatprep.subr.mxu0 0.0
    %2629 = vmatpush1.msra.mxu0 0.0
    %2630 = vmatprep.subr.mxu0 0.0
    %2631 = vmatpush1.msra.mxu0 0.0
    %2632 = vmatprep.subr.mxu0 0.0
    %2633 = vmatpush1.msra.mxu0 0.0
    %2634 = vmatprep.subr.mxu0 0.0
    %2635 = vmatpush1.msra.mxu0 0.0
    %2636 = vmatprep.subr.mxu0 0.0
    %2637 = vmatpush1.msra.mxu0 0.0
    %2638 = vmatprep.subr.mxu0 0.0
    %2639 = vmatpush1.msra.mxu0 0.0
    %2640 = vmatprep.subr.mxu0 0.0
    %2641 = vmatpush1.msra.mxu0 0.0
    %2642 = vmatprep.subr.mxu0 0.0
    %2643 = vmatpush1.msra.mxu0 0.0
    %2644 = vmatprep.subr.mxu0 0.0
    %2645 = vmatpush1.msra.mxu0 0.0
    %2646 = vmatprep.subr.mxu0 0.0
    %2647 = vmatpush1.msra.mxu0 0.0
    %2648 = vmatprep.subr.mxu0 0.0
    %2649 = vmatpush1.msra.mxu0 0.0
    %2650 = vmatprep.subr.mxu0 0.0
    %2651 = vmatpush1.msra.mxu0 0.0
    %2652 = vmatprep.subr.mxu0 0.0
    %2653 = vmatpush1.msra.mxu0 0.0
    %2654 = vmatprep.subr.mxu0 0.0
    %2655 = vmatpush1.msra.mxu0 0.0
    %2656 = vmatprep.subr.mxu0 0.0
    %2657 = vmatpush1.msra.mxu0 0.0
    %2658 = vmatprep.subr.mxu0 0.0
    %2659 = vmatpush1.msra.mxu0 0.0
    %2660 = vmatprep.mubr.f32.mxu0 0.0
    %v2661 = vand.u32 %v2223, 4294901760
    %2662 = vmatmul.mubr.f32.gmra.mrb[0].mxu0 %v2661
    %v2663 = vpop.f32.mrb[0].mxu0
    %v2664 = vadd.f32 %v2574, %v2663
    %v2665 = vpop.f32.mrb[0].mxu0
    %2666 = vmatprep.mubr.f32.mxu0 0.0
    %v2667 = vand.u32 %v2226, 4294901760
    %2668 = vmatmul.mubr.f32.gmra.mrb[0].mxu0 %v2667
    %v2669 = vpop.f32.mrb[0].mxu0
    %v2670 = vadd.f32 %v2582, %v2669
    %v2671 = vpop.f32.mrb[0].mxu0
    %2672 = vmatprep.mubr.f32.mxu0 0.0
    %v2673 = vand.u32 %v2229, 4294901760
    %2674 = vmatmul.mubr.f32.gmra.mrb[0].mxu0 %v2673
    %v2675 = vpop.f32.mrb[0].mxu0
    %v2676 = vadd.f32 %v2590, %v2675
    %v2677 = vpop.f32.mrb[0].mxu0
    %2678 = vdwg.mxu0
    %2679 = vmatprep.subr.mxu0 0.0
    %v2680 = vand.u32 %v1688, 4294901760
    %2681 = vmatpush1.msra.mxu0 %v2680
    %2682 = vmatprep.subr.mxu0 0.0
    %2683 = vmatpush1.msra.mxu0 0.0
    %2684 = vmatprep.subr.mxu0 0.0
    %2685 = vmatpush1.msra.mxu0 0.0
    %2686 = vmatprep.subr.mxu0 0.0
    %2687 = vmatpush1.msra.mxu0 0.0
    %2688 = vmatprep.subr.mxu0 0.0
    %2689 = vmatpush1.msra.mxu0 0.0
    %2690 = vmatprep.subr.mxu0 0.0
    %2691 = vmatpush1.msra.mxu0 0.0
    %2692 = vmatprep.subr.mxu0 0.0
    %2693 = vmatpush1.msra.mxu0 0.0
    %2694 = vmatprep.subr.mxu0 0.0
    %2695 = vmatpush1.msra.mxu0 0.0
    %2696 = vmatprep.subr.mxu0 0.0
    %2697 = vmatpush1.msra.mxu0 0.0
    %2698 = vmatprep.subr.mxu0 0.0
    %2699 = vmatpush1.msra.mxu0 0.0
    %2700 = vmatprep.subr.mxu0 0.0
    %2701 = vmatpush1.msra.mxu0 0.0
    %2702 = vmatprep.subr.mxu0 0.0
    %2703 = vmatpush1.msra.mxu0 0.0
    %2704 = vmatprep.subr.mxu0 0.0
    %2705 = vmatpush1.msra.mxu0 0.0
    %2706 = vmatprep.subr.mxu0 0.0
    %2707 = vmatpush1.msra.mxu0 0.0
    %2708 = vmatprep.subr.mxu0 0.0
    %2709 = vmatpush1.msra.mxu0 0.0
    %2710 = vmatprep.subr.mxu0 0.0
    %2711 = vmatpush1.msra.mxu0 0.0
    %2712 = vmatprep.subr.mxu0 0.0
    %2713 = vmatpush1.msra.mxu0 0.0
    %2714 = vmatprep.subr.mxu0 0.0
    %2715 = vmatpush1.msra.mxu0 0.0
    %2716 = vmatprep.subr.mxu0 0.0
    %2717 = vmatpush1.msra.mxu0 0.0
    %2718 = vmatprep.subr.mxu0 0.0
    %2719 = vmatpush1.msra.mxu0 0.0
    %2720 = vmatprep.subr.mxu0 0.0
    %2721 = vmatpush1.msra.mxu0 0.0
    %2722 = vmatprep.subr.mxu0 0.0
    %2723 = vmatpush1.msra.mxu0 0.0
    %2724 = vmatprep.subr.mxu0 0.0
    %2725 = vmatpush1.msra.mxu0 0.0
    %2726 = vmatprep.subr.mxu0 0.0
    %2727 = vmatpush1.msra.mxu0 0.0
    %2728 = vmatprep.subr.mxu0 0.0
    %2729 = vmatpush1.msra.mxu0 0.0
    %2730 = vmatprep.subr.mxu0 0.0
    %2731 = vmatpush1.msra.mxu0 0.0
    %2732 = vmatprep.subr.mxu0 0.0
    %2733 = vmatpush1.msra.mxu0 0.0
    %2734 = vmatprep.subr.mxu0 0.0
    %2735 = vmatpush1.msra.mxu0 0.0
    %2736 = vmatprep.subr.mxu0 0.0
    %2737 = vmatpush1.msra.mxu0 0.0
    %2738 = vmatprep.subr.mxu0 0.0
    %2739 = vmatpush1.msra.mxu0 0.0
    %2740 = vmatprep.subr.mxu0 0.0
    %2741 = vmatpush1.msra.mxu0 0.0
    %2742 = vmatprep.subr.mxu0 0.0
    %2743 = vmatpush1.msra.mxu0 0.0
    %2744 = vmatprep.mubr.f32.mxu0 0.0
    %v2745 = vand.u32 %v2223, 4294901760
    %2746 = vmatmul.mubr.f32.gmra.mrb[0].mxu0 %v2745
    %v2747 = vpop.f32.mrb[0].mxu0
    %v2748 = vadd.f32 %v2664, %v2747
    %v2749 = vpop.f32.mrb[0].mxu0
    %2750 = vmatprep.mubr.f32.mxu0 0.0
    %v2751 = vand.u32 %v2226, 4294901760
    %2752 = vmatmul.mubr.f32.gmra.mrb[0].mxu0 %v2751
    %v2753 = vpop.f32.mrb[0].mxu0
    %v2754 = vadd.f32 %v2670, %v2753
    %v2755 = vpop.f32.mrb[0].mxu0
    %2756 = vmatprep.mubr.f32.mxu0 0.0
    %v2757 = vand.u32 %v2229, 4294901760
    %2758 = vmatmul.mubr.f32.gmra.mrb[0].mxu0 %v2757
    %v2759 = vpop.f32.mrb[0].mxu0
    %v2760 = vadd.f32 %v2676, %v2759
    %v2761 = vpop.f32.mrb[0].mxu0
    %2762 = vdwg.mxu0
    %v2763 = vsub.f32 %v2207, %v15
    %v2764 = vsub.f32 %v2213, %v16
    %v2765 = vsub.f32 %v2219, %v17
    %v2766 = vmul.f32 %v2763, %v2763
    %v2767 = vmul.f32 %v2764, %v2764
    %v2768 = vmul.f32 %v2765, %v2765
    %v2769 = vsel %vm28, %v2766, 0.0
    %v2770 = vsel %vm28, %v2767, 0.0
    %v2771 = vadd.f32 %v2769, %v2770
    %v2772 = vsel %vm28, %v2768, 0.0
    %v2773 = vadd.f32 %v2771, %v2772
    %2774 = vadd.xlane.f32.xlu0 %v2773
    %v2775 = vpop.xlane.xlu0 %2774
    %v2776 = vrot.slane %v2775, 4
    %v2777 = vadd.f32 %v2775, %v2776
    %v2778 = vrot.slane %v2777, 2
    %v2779 = vadd.f32 %v2777, %v2778
    %v2780 = vrot.slane %v2779, 1
    %v2781 = vadd.f32 %v2779, %v2780
    %s2782 = vtos %v2781
    %v2783 = vstv %s2782
    %v2784 = vrcp.pop 48.0
    %v2785 = vmul.f32 %v2783, %v2784
    %v2786 = vmul.f32 %v2785, 3.0
    %v2787 = vsub.f32 %v2748, %v15
    %v2788 = vsub.f32 %v2754, %v16
    %v2789 = vsub.f32 %v2760, %v17
    %v2790 = vmul.f32 %v2787, %v2787
    %v2791 = vmul.f32 %v2788, %v2788
    %v2792 = vmul.f32 %v2789, %v2789
    %v2793 = vsel %vm28, %v2790, 0.0
    %v2794 = vsel %vm28, %v2791, 0.0
    %v2795 = vadd.f32 %v2793, %v2794
    %v2796 = vsel %vm28, %v2792, 0.0
    %v2797 = vadd.f32 %v2795, %v2796
    %2798 = vadd.xlane.f32.xlu0 %v2797
    %v2799 = vpop.xlane.xlu0 %2798
    %v2800 = vrot.slane %v2799, 4
    %v2801 = vadd.f32 %v2799, %v2800
    %v2802 = vrot.slane %v2801, 2
    %v2803 = vadd.f32 %v2801, %v2802
    %v2804 = vrot.slane %v2803, 1
    %v2805 = vadd.f32 %v2803, %v2804
    %s2806 = vtos %v2805
    %v2807 = vstv %s2806
    %v2808 = vmul.f32 %v2807, %v2784
    %v2809 = vmul.f32 %v2808, 3.0
    %v2810 = vsel %vm28, %v1657, 0.0
    %v2811 = vsel %vm28, %v1663, 0.0
    %v2812 = vadd.f32 %v2810, %v2811
    %v2813 = vsel %vm28, %v1669, 0.0
    %v2814 = vadd.f32 %v2812, %v2813
    %v2815 = vrot.slane %v2814, 4
    %v2816 = vadd.f32 %v2814, %v2815
    %v2817 = vrot.slane %v2816, 2
    %v2818 = vadd.f32 %v2816, %v2817
    %v2819 = vrot.slane %v2818, 1
    %v2820 = vadd.f32 %v2818, %v2819
    %v2821 = vrcp.pop 24.0
    %v2822 = vmul.f32 %v2820, %v2821
    %v2823 = vsel %vm28, %v15, 0.0
    %v2824 = vsel %vm28, %v16, 0.0
    %v2825 = vadd.f32 %v2823, %v2824
    %v2826 = vsel %vm28, %v17, 0.0
    %v2827 = vadd.f32 %v2825, %v2826
    %v2828 = vrot.slane %v2827, 4
    %v2829 = vadd.f32 %v2827, %v2828
    %v2830 = vrot.slane %v2829, 2
    %v2831 = vadd.f32 %v2829, %v2830
    %v2832 = vrot.slane %v2831, 1
    %v2833 = vadd.f32 %v2831, %v2832
    %v2834 = vmul.f32 %v2833, %v2821
    %v2835 = vld [vmem:[%s1 + $0x12] sm:$0x7]
    %v2836 = vmax.f32 %v2835, 0.0
    %v2837 = vand.u32 2147483647, %v2835
    %v2838 = vsub.f32 0.0, %v2837
    %v2839 = vmul.f32 %v2838, 1.442695
    %v2840 = vpow.pop %v2839
    %v2841 = vadd.f32 %v2840, 1.0
    %v2842 = vlog2.pop %v2841
    %v2843 = vmul.f32 %v2842, 0.6931472
    %v2844 = vadd.f32 %v2836, %v2843
    %v2845 = vadd.f32 %v2844, 1e-05
    %vm2846 = vcmask 26624
    %v2847 = vsel %vm2846, %v2845, 0.0
    %v2848 = vrot.slane %v2847, 4
    %v2849 = vadd.f32 %v2847, %v2848
    %v2850 = vrot.slane %v2849, 2
    %v2851 = vadd.f32 %v2849, %v2850
    %v2852 = vrot.slane %v2851, 1
    %v2853 = vadd.f32 %v2851, %v2852
    %v2854 = vrcp.pop 3.0
    %v2855 = vmul.f32 %v2853, %v2854
    %v2856 = vlog2.pop %v2855
    %v2857 = vmul.f32 %v2856, 0.6931472
    %vm2858 = vcmask 24576
    %v2859 = vsel %vm2858, %v2857, 0.0
    %2860 = vadd.xlane.f32.xlu0 %v2859
    %v2861 = vpop.xlane.xlu0 %2860
    %v2862 = vrot.slane %v2861, 4
    %v2863 = vadd.f32 %v2861, %v2862
    %v2864 = vrot.slane %v2863, 2
    %v2865 = vadd.f32 %v2863, %v2864
    %v2866 = vrot.slane %v2865, 1
    %v2867 = vadd.f32 %v2865, %v2866
    %s2868 = vtos %v2867
    %v2869 = vstv %s2868
    %v2870 = vrcp.pop 4.0
    %v2871 = vmul.f32 %v2869, %v2870
    %v2872 = vsub.f32 %v2822, %v1657
    %v2873 = vsub.f32 %v2822, %v1663
    %v2874 = vsub.f32 %v2822, %v1669
    %v2875 = vmul.f32 %v2872, %v2872
    %v2876 = vmul.f32 %v2873, %v2873
    %v2877 = vmul.f32 %v2874, %v2874
    %v2878 = vsel %vm28, %v2875, 0.0
    %v2879 = vsel %vm28, %v2876, 0.0
    %v2880 = vadd.f32 %v2878, %v2879
    %v2881 = vsel %vm28, %v2877, 0.0
    %v2882 = vadd.f32 %v2880, %v2881
    %2883 = vadd.xlane.f32.xlu0 %v2882
    %v2884 = vpop.xlane.xlu0 %2883
    %v2885 = vrot.slane %v2884, 4
    %v2886 = vadd.f32 %v2884, %v2885
    %v2887 = vrot.slane %v2886, 2
    %v2888 = vadd.f32 %v2886, %v2887
    %v2889 = vrot.slane %v2888, 1
    %v2890 = vadd.f32 %v2888, %v2889
    %s2891 = vtos %v2890
    %v2892 = vstv %s2891
    %v2893 = vsub.f32 %v2834, %v15
    %v2894 = vsub.f32 %v2834, %v16
    %v2895 = vsub.f32 %v2834, %v17
    %v2896 = vmul.f32 %v2893, %v2893
    %v2897 = vmul.f32 %v2894, %v2894
    %v2898 = vmul.f32 %v2895, %v2895
    %v2899 = vsel %vm28, %v2896, 0.0
    %v2900 = vsel %vm28, %v2897, 0.0
    %v2901 = vadd.f32 %v2899, %v2900
    %v2902 = vsel %vm28, %v2898, 0.0
    %v2903 = vadd.f32 %v2901, %v2902
    %2904 = vadd.xlane.f32.xlu0 %v2903
    %v2905 = vpop.xlane.xlu0 %2904
    %v2906 = vrot.slane %v2905, 4
    %v2907 = vadd.f32 %v2905, %v2906
    %v2908 = vrot.slane %v2907, 2
    %v2909 = vadd.f32 %v2907, %v2908
    %v2910 = vrot.slane %v2909, 1
    %v2911 = vadd.f32 %v2909, %v2910
    %s2912 = vtos %v2911
    %v2913 = vstv %s2912
    %v2914 = vadd.f32 %v2892, %v2913
    %v2915 = vmul.f32 %v2914, 0.010416667
    %v2916 = vadd.f32 %v2915, %v2871
    %v2917 = vmul.f32 %v2916, 0.05
    %v2918 = vlaneseq
    %v2919 = vand.u32 %v2918, 127
    %vm2920 = vcmp.eq.s32.totalorder %v2919, 0
    %vm2921 = vcmp.eq.s32.totalorder %v2919, 1
    %vm2922 = vcmp.eq.s32.totalorder %v2919, 2
    %v2923 = vsel %vm2922, %v2917, 0.0
    %v2924 = vsel %vm2921, %v2809, %v2923
    %v2925 = vsel %vm2920, %v2786, %v2924
    %2926 = vst [vmem:[#allocation2] sm:$0x1] %v2925
    // Predicated region
    $region10: #{tpu_custom_call.1} parent=1 // pred_check
      _
    $region11: #{tpu_custom_call.1} parent=1 // pred_check_branch
      %2928 = sbr.rel (0) target = $region13
    $region12: #{tpu_custom_call.1} parent=1 // pred_region
      %s2930 = ssub.s32 16, 16
      %2931 = vsyncadd [#allocation3], %s2930
      %s2933 = sshll.u32 [#allocation2], 4
      %s2934 = int_to_ptr.vmem [resolvable:$true] %s2933
      %2936 = dma.vmem_to_hbm [thread:$0]  %s2934, 16, %s2, [#allocation3]
    $region13: #{tpu_custom_call.1} parent=1 // pred_fallthru
      _
    // Predicated region
    $region14: #{tpu_custom_call.1} parent=1 // pred_check
      _
    $region15: #{tpu_custom_call.1} parent=1 // pred_check_branch
      %2938 = sbr.rel (0) target = $region17
    $region16: #{tpu_custom_call.1} parent=1 // pred_region
      %2939 = dma.done [#allocation3], 16
    $region17: #{tpu_custom_call.1} parent=1 // pred_fallthru
      _
    %2940 = vsyncpa [#allocation3], 1

</llo_original>
